<compile_context>
chip_gen: v6e
topology: v6e:2x2x1
jax: 0.10.0
libtpu: 0.0.40
codegen_flags: <defaults>
</compile_context>

<pallas_src>
import math
import functools

import jax
import jax.numpy as jnp
from jax import lax
from jax.experimental import pallas as pl
from jax.experimental.pallas import tpu as pltpu


# ----------------------------------------------------------------------------
# Fused flash-style MHA kernel.
# Grid: (B, T//tq, T//tk); kv axis is innermost and "arbitrary".
# Blocks: xq/o (1, tq, C); xk/xv (1, tk, C); weights (C, C) resident; biases
# (1, C) resident.  Scratch persists across kv steps of one (b, q-tile).
# ----------------------------------------------------------------------------
def _mha_kernel(xq_ref, xk_ref, xv_ref,
                wq_ref, wk_ref, wv_ref, wp_ref,
                bq_ref, bk_ref, bv_ref, bp_ref,
                o_ref,
                q_scr, m_scr, l_scr, acc_scr,
                *, n_head, scale, is_causal, tq, tk, compute_dtype):
    qi = pl.program_id(1)
    ki = pl.program_id(2)
    n_kv = pl.num_programs(2)

    C = wq_ref.shape[0]
    D = C // n_head

    # ---- first kv step of this (batch, q tile): project q, init state ------
    @pl.when(ki == 0)
    def _():
        q = jnp.dot(xq_ref[0], wq_ref[...],
                    preferred_element_type=jnp.float32) + bq_ref[...]
        # fold 1/sqrt(D) into q: touches tq*C elements instead of tq*tk per head
        q_scr[...] = (q * scale).astype(q_scr.dtype)
        m_scr[...] = jnp.full(m_scr.shape, -jnp.inf, m_scr.dtype)
        l_scr[...] = jnp.zeros(l_scr.shape, l_scr.dtype)
        acc_scr[...] = jnp.zeros(acc_scr.shape, acc_scr.dtype)

    # ---- one kv tile: project k/v and do the online-softmax update ---------
    def process_kv_tile():
        k = jnp.dot(xk_ref[0], wk_ref[...],
                    preferred_element_type=jnp.float32) + bk_ref[...]
        v = jnp.dot(xv_ref[0], wv_ref[...],
                    preferred_element_type=jnp.float32) + bv_ref[...]
        k = k.astype(compute_dtype)
        v = v.astype(compute_dtype)

        if is_causal:
            row = qi * tq + lax.broadcasted_iota(jnp.int32, (tq, tk), 0)
            col = ki * tk + lax.broadcasted_iota(jnp.int32, (tq, tk), 1)
            allowed = col <= row

        # Per-head online-softmax update.  All cross-iteration state is in VMEM
        # scratch refs, so per-head temporaries have bounded live ranges.  Lane
        # slices are aligned (unmasked) whenever D % 128 == 0 (real configs);
        # the tiny demo D only pads vregs but stays correct.
        for h in range(n_head):
            lo = h * D
            qh = q_scr[:, lo:lo + D]                       # (tq, D)
            kh = k[:, lo:lo + D]                           # (tk, D)
            vh = v[:, lo:lo + D]                           # (tk, D)

            # scores: contract last dims directly (no k transpose / XLU pass)
            s = lax.dot_general(qh, kh, (((1,), (1,)), ((), ())),
                                preferred_element_type=jnp.float32)  # (tq, tk)
            if is_causal:
                # large finite negative so a masked row can never produce NaN
                s = jnp.where(allowed, s, -1e30)

            m_prev = m_scr[h]                              # (tq, 1)
            m_new = jnp.maximum(m_prev, jnp.max(s, axis=-1, keepdims=True))
            alpha = jnp.exp(m_prev - m_new)
            p = jnp.exp(s - m_new)                         # un-normalized probs
            l_scr[h] = alpha * l_scr[h] + jnp.sum(p, axis=-1, keepdims=True)
            pv = jnp.dot(p.astype(compute_dtype), vh,
                         preferred_element_type=jnp.float32)          # (tq, D)
            acc_scr[:, lo:lo + D] = alpha * acc_scr[:, lo:lo + D] + pv
            m_scr[h] = m_new

    if is_causal:
        # Skip kv tiles that are entirely in the future of every query row
        # (also skips their k/v projection matmuls).
        @pl.when(ki * tk <= (qi + 1) * tq - 1)
        def _():
            process_kv_tile()
    else:
        process_kv_tile()

    # ---- last kv step: normalize, merge heads, output projection -----------
    @pl.when(ki == n_kv - 1)
    def _():
        approx = jnp.dtype(compute_dtype) != jnp.dtype(jnp.float32)
        inv_l = pl.reciprocal(l_scr[...], approx=bool(approx))  # (n_head, tq, 1)
        for h in range(n_head):
            lo = h * D
            acc_scr[:, lo:lo + D] = acc_scr[:, lo:lo + D] * inv_l[h]
        y_heads = acc_scr[...].astype(compute_dtype)             # (tq, C)
        # single fused output projection with K = C (head merge is implicit)
        y = jnp.dot(y_heads, wp_ref[...],
                    preferred_element_type=jnp.float32) + bp_ref[...]
        o_ref[0] = y.astype(o_ref.dtype)
    # TODO(synk): attn_dropout / resid_dropout are identity at inference (p=0).


def _pick_tile(t, cap):
    for cand in (cap, 512, 256, 128):
        if cand <= t and t % cand == 0:
            return cand
    return t


def multi_head_attention(params, query, key, value, *, n_head, is_causal=False,
                         compute_dtype=jnp.bfloat16, tq=None, tk=None):
    """query/key/value: (B, T, C) -> (B, T, C).  One fused flash-style pallas_call."""
    B, T, C = query.shape
    assert C % n_head == 0, "n_embd must be divisible by n_head"
    D = C // n_head
    out_dtype = query.dtype

    tq = tq if tq is not None else _pick_tile(T, 256)
    tk = tk if tk is not None else _pick_tile(T, 512)
    assert T % tq == 0 and T % tk == 0

    # bf16 operands for every MXU matmul (f32 accumulation inside the kernel);
    # halves resident-weight VMEM and activation DMA bytes vs f32.
    xq = query.astype(compute_dtype)
    xk = key.astype(compute_dtype)
    xv = value.astype(compute_dtype)
    wq = params["wq"].astype(compute_dtype)
    wk = params["wk"].astype(compute_dtype)
    wv = params["wv"].astype(compute_dtype)
    wp = params["wp"].astype(compute_dtype)
    bq = params["bq"].astype(jnp.float32)
    bk = params["bk"].astype(jnp.float32)
    bv = params["bv"].astype(jnp.float32)
    bp = params["bp"].astype(jnp.float32)

    kernel = functools.partial(
        _mha_kernel, n_head=n_head, scale=1.0 / math.sqrt(D),
        is_causal=is_causal, tq=tq, tk=tk, compute_dtype=compute_dtype)

    xq_spec = pl.BlockSpec((1, tq, C), lambda b, qi, ki: (b, qi, 0))
    xkv_spec = pl.BlockSpec((1, tk, C), lambda b, qi, ki: (b, ki, 0))
    w_spec = pl.BlockSpec((C, C), lambda b, qi, ki: (0, 0))   # stays resident
    b_spec = pl.BlockSpec((1, C), lambda b, qi, ki: (0, 0))   # stays resident
    o_spec = pl.BlockSpec((1, tq, C), lambda b, qi, ki: (b, qi, 0))

    cd = jnp.dtype(compute_dtype).itemsize
    vmem_est = (4 * C * C * cd                         # resident weights
                + 4 * C * 4                            # resident biases (f32)
                + 2 * (tq + 2 * tk) * C * cd           # double-buffered x blocks
                + 2 * tq * C * jnp.dtype(out_dtype).itemsize   # output blocks
                + tq * C * cd                          # q scratch
                + 2 * n_head * tq * 4                  # m / l scratch
                + tq * C * 4)                          # acc scratch
    vmem_limit = int(min(max(2 * vmem_est, 16 << 20), 96 << 20))

    # TODO(synk): for very large C (>= ~2048 on v7x) stream (C, C) weight tiles
    # from HBM (memory_space=pl.ANY + emit_pipeline) instead of keeping them
    # resident, and for self-attention pass the activation once instead of 3x.
    return pl.pallas_call(
        kernel,
        out_shape=jax.ShapeDtypeStruct((B, T, C), out_dtype),
        grid=(B, T // tq, T // tk),
        in_specs=[xq_spec, xkv_spec, xkv_spec,
                  w_spec, w_spec, w_spec, w_spec,
                  b_spec, b_spec, b_spec, b_spec],
        out_specs=o_spec,
        scratch_shapes=[pltpu.VMEM((tq, C), compute_dtype),       # q (scaled)
                        pltpu.VMEM((n_head, tq, 1), jnp.float32),  # running max
                        pltpu.VMEM((n_head, tq, 1), jnp.float32),  # running denom
                        pltpu.VMEM((tq, C), jnp.float32)],         # P@V accum
        compiler_params=pltpu.CompilerParams(
            dimension_semantics=("parallel", "parallel", "arbitrary"),
            vmem_limit_bytes=vmem_limit),
    )(xq, xk, xv, wq, wk, wv, wp, bq, bk, bv, bp)


# ----------------------------------------------------------------------------
# Reference (pure JAX, f32) for correctness check
# ----------------------------------------------------------------------------
def reference_mha(params, query, key, value, *, n_head, is_causal=False):
    B, T, C = query.shape
    D = C // n_head

    def lin(x, w, b):
        return x @ w + b[0]

    q = lin(query, params["wq"], params["bq"])
    k = lin(key, params["wk"], params["bk"])
    v = lin(value, params["wv"], params["bv"])

    def split(x):
        return x.reshape(B, T, n_head, D).transpose(0, 2, 1, 3)

    qh, kh, vh = split(q), split(k), split(v)
    s = jnp.einsum("bhqd,bhkd->bhqk", qh, kh) / math.sqrt(D)
    if is_causal:
        mask = jnp.tril(jnp.ones((T, T), dtype=bool))
        s = jnp.where(mask[None, None], s, -jnp.inf)
    p = jax.nn.softmax(s, axis=-1)
    y = jnp.einsum("bhqk,bhkd->bhqd", p, vh)
    y = y.transpose(0, 2, 1, 3).reshape(B, T, C)
    return lin(y, params["wp"], params["bp"])


# ----------------------------------------------------------------------------
if __name__ == "__main__":
    # module config: n_embd=32, n_head=4, bias=True, dropout=0.0
    B, T, C, H = 2, 8, 32, 4

    key0 = jax.random.PRNGKey(0)
    keys = jax.random.split(key0, 14)

    def init_linear(kw, kb, fan_in, fan_out):
        bound = 1.0 / math.sqrt(fan_in)
        w = jax.random.uniform(kw, (fan_in, fan_out), jnp.float32, -bound, bound)
        b = jax.random.uniform(kb, (1, fan_out), jnp.float32, -bound, bound)
        return w, b

    wq, bq = init_linear(keys[0], keys[1], C, C)
    wk, bk = init_linear(keys[2], keys[3], C, C)
    wv, bv = init_linear(keys[4], keys[5], C, C)
    wp, bp = init_linear(keys[6], keys[7], C, C)
    params = dict(wq=wq, bq=bq, wk=wk, bk=bk, wv=wv, bv=bv, wp=wp, bp=bp)

    query = jax.random.normal(keys[8], (B, T, C), jnp.float32)
    key_in = jax.random.normal(keys[9], (B, T, C), jnp.float32)
    value = jax.random.normal(keys[10], (B, T, C), jnp.float32)

    # 1) f32 compute path (single kv tile) -- strict tolerance
    out = jax.block_until_ready(multi_head_attention(
        params, query, key_in, value, n_head=H, compute_dtype=jnp.float32))
    ref = reference_mha(params, query, key_in, value, n_head=H)
    assert out.shape == (B, T, C)
    assert jnp.allclose(out, ref, atol=1e-5, rtol=1e-5), "f32 mismatch vs reference"

    # 2) default bf16 MXU path -- bf16-level tolerance
    out_bf = jax.block_until_ready(multi_head_attention(
        params, query, key_in, value, n_head=H))
    assert jnp.allclose(out_bf, ref, atol=2e-2, rtol=2e-2), "bf16 mismatch vs reference"

    # 3) longer sequence exercising q/kv tiling, online softmax and causal
    #    block skipping (still small: T=256, C=32)
    T2, TQ, TK = 256, 64, 64
    q2 = jax.random.normal(keys[11], (B, T2, C), jnp.float32)
    k2 = jax.random.normal(keys[12], (B, T2, C), jnp.float32)
    v2 = jax.random.normal(keys[13], (B, T2, C), jnp.float32)
    ref_c = reference_mha(params, q2, k2, v2, n_head=H, is_causal=True)

    out_c32 = jax.block_until_ready(multi_head_attention(
        params, q2, k2, v2, n_head=H, is_causal=True,
        compute_dtype=jnp.float32, tq=TQ, tk=TK))
    assert jnp.allclose(out_c32, ref_c, atol=1e-4, rtol=1e-4), \
        "tiled causal f32 mismatch vs reference"

    out_cbf = jax.block_until_ready(multi_head_attention(
        params, q2, k2, v2, n_head=H, is_causal=True, tq=TQ, tk=TK))
    assert jnp.allclose(out_cbf, ref_c, atol=2e-2, rtol=2e-2), \
        "tiled causal bf16 mismatch vs reference"

    print("KERNEL_OK")
</pallas_src>

<mosaic_0001>
module attributes {stable_mosaic.version = 11 : i64} {
  func.func @_mha_kernel(%arg0: i32, %arg1: i32, %arg2: i32, %arg3: memref<1x8x32xf32, #tpu.memory_space<vmem>>, %arg4: memref<1x8x32xf32, #tpu.memory_space<vmem>>, %arg5: memref<1x8x32xf32, #tpu.memory_space<vmem>>, %arg6: memref<32x32xf32, #tpu.memory_space<vmem>>, %arg7: memref<32x32xf32, #tpu.memory_space<vmem>>, %arg8: memref<32x32xf32, #tpu.memory_space<vmem>>, %arg9: memref<32x32xf32, #tpu.memory_space<vmem>>, %arg10: memref<1x32xf32, #tpu.memory_space<vmem>>, %arg11: memref<1x32xf32, #tpu.memory_space<vmem>>, %arg12: memref<1x32xf32, #tpu.memory_space<vmem>>, %arg13: memref<1x32xf32, #tpu.memory_space<vmem>>, %arg14: memref<1x8x32xf32, #tpu.memory_space<vmem>>, %arg15: memref<8x32xf32, #tpu.memory_space<vmem>>, %arg16: memref<4x8x1xf32, #tpu.memory_space<vmem>>, %arg17: memref<4x8x1xf32, #tpu.memory_space<vmem>>, %arg18: memref<8x32xf32, #tpu.memory_space<vmem>>) attributes {dimension_semantics = [#tpu.dimension_semantics<parallel>, #tpu.dimension_semantics<parallel>, #tpu.dimension_semantics<arbitrary>], iteration_bounds = array<i64: 2, 1, 1>, scalar_prefetch = 0 : i64, scratch_operands = 4 : i64, tpu.core_type = #tpu.core_type<tc>, window_params = [{transform_indices = @transform_0, window_bounds = array<i64: 1, 8, 32>}, {transform_indices = @transform_1, window_bounds = array<i64: 1, 8, 32>}, {transform_indices = @transform_2, window_bounds = array<i64: 1, 8, 32>}, {pipeline_mode = #tpu.pipeline_mode<synchronous>, transform_indices = @transform_3, window_bounds = array<i64: 32, 32>}, {pipeline_mode = #tpu.pipeline_mode<synchronous>, transform_indices = @transform_4, window_bounds = array<i64: 32, 32>}, {pipeline_mode = #tpu.pipeline_mode<synchronous>, transform_indices = @transform_5, window_bounds = array<i64: 32, 32>}, {pipeline_mode = #tpu.pipeline_mode<synchronous>, transform_indices = @transform_6, window_bounds = array<i64: 32, 32>}, {pipeline_mode = #tpu.pipeline_mode<synchronous>, transform_indices = @transform_7, window_bounds = array<i64: 1, 32>}, {pipeline_mode = #tpu.pipeline_mode<synchronous>, transform_indices = @transform_8, window_bounds = array<i64: 1, 32>}, {pipeline_mode = #tpu.pipeline_mode<synchronous>, transform_indices = @transform_9, window_bounds = array<i64: 1, 32>}, {pipeline_mode = #tpu.pipeline_mode<synchronous>, transform_indices = @transform_10, window_bounds = array<i64: 1, 32>}, {transform_indices = @transform_11, window_bounds = array<i64: 1, 8, 32>}]} {
    %c0_i32 = arith.constant 0 : i32
    %0 = arith.cmpi eq, %arg2, %c0_i32 : i32
    %1 = arith.extui %0 : i1 to i32
    %c0_i32_0 = arith.constant 0 : i32
    %2 = arith.cmpi ne, %1, %c0_i32_0 : i32
    scf.if %2 {
      %c0_99 = arith.constant 0 : index
      %c0_100 = arith.constant 0 : index
      %c0_101 = arith.constant 0 : index
      %148 = vector.load %arg3[%c0_99, %c0_100, %c0_101] : memref<1x8x32xf32, #tpu.memory_space<vmem>>, vector<1x8x32xf32>
      %149 = vector.shape_cast %148 : vector<1x8x32xf32> to vector<8x32xf32>
      %c0_102 = arith.constant 0 : index
      %c0_103 = arith.constant 0 : index
      %150 = vector.load %arg6[%c0_102, %c0_103] : memref<32x32xf32, #tpu.memory_space<vmem>>, vector<32x32xf32>
      %cst_104 = arith.constant dense<0.000000e+00> : vector<8x32xf32>
      %151 = tpu.matmul %149, %150, %cst_104 {dimension_numbers = #tpu.dot_dimension_numbers<[1], [0], [0], [1], [0, 0, 1, 1], [], []>} : vector<8x32xf32>, vector<32x32xf32>, vector<8x32xf32> -> vector<8x32xf32>
      %c0_105 = arith.constant 0 : index
      %c0_106 = arith.constant 0 : index
      %152 = vector.load %arg10[%c0_105, %c0_106] : memref<1x32xf32, #tpu.memory_space<vmem>>, vector<1x32xf32>
      %153 = vector.broadcast %152 : vector<1x32xf32> to vector<8x32xf32>
      %154 = arith.addf %151, %153 : vector<8x32xf32>
      %cst_107 = arith.constant 0.353553385 : f32
      %155 = vector.broadcast %cst_107 : f32 to vector<8x32xf32>
      %156 = arith.mulf %154, %155 : vector<8x32xf32>
      %c0_108 = arith.constant 0 : index
      %c0_109 = arith.constant 0 : index
      %157 = vector.load %arg15[%c0_108, %c0_109] : memref<8x32xf32, #tpu.memory_space<vmem>>, vector<8x32xf32>
      tpu.vector_store %arg15[%c0_108, %c0_109], %156 {strides = array<i32>} : memref<8x32xf32, #tpu.memory_space<vmem>>, vector<8x32xf32>,
      %cst_110 = arith.constant 0xFF800000 : f32
      %158 = vector.broadcast %cst_110 : f32 to vector<4x8x1xf32>
      %c0_111 = arith.constant 0 : index
      %c0_112 = arith.constant 0 : index
      %c0_113 = arith.constant 0 : index
      %159 = vector.load %arg16[%c0_111, %c0_112, %c0_113] : memref<4x8x1xf32, #tpu.memory_space<vmem>>, vector<4x8x1xf32>
      tpu.vector_store %arg16[%c0_111, %c0_112, %c0_113], %158 {strides = array<i32>} : memref<4x8x1xf32, #tpu.memory_space<vmem>>, vector<4x8x1xf32>,
      %cst_114 = arith.constant 0.000000e+00 : f32
      %160 = vector.broadcast %cst_114 : f32 to vector<4x8x1xf32>
      %c0_115 = arith.constant 0 : index
      %c0_116 = arith.constant 0 : index
      %c0_117 = arith.constant 0 : index
      %161 = vector.load %arg17[%c0_115, %c0_116, %c0_117] : memref<4x8x1xf32, #tpu.memory_space<vmem>>, vector<4x8x1xf32>
      tpu.vector_store %arg17[%c0_115, %c0_116, %c0_117], %160 {strides = array<i32>} : memref<4x8x1xf32, #tpu.memory_space<vmem>>, vector<4x8x1xf32>,
      %cst_118 = arith.constant 0.000000e+00 : f32
      %162 = vector.broadcast %cst_118 : f32 to vector<8x32xf32>
      %c0_119 = arith.constant 0 : index
      %c0_120 = arith.constant 0 : index
      %163 = vector.load %arg18[%c0_119, %c0_120] : memref<8x32xf32, #tpu.memory_space<vmem>>, vector<8x32xf32>
      tpu.vector_store %arg18[%c0_119, %c0_120], %162 {strides = array<i32>} : memref<8x32xf32, #tpu.memory_space<vmem>>, vector<8x32xf32>,
    } else {
    }
    %c0 = arith.constant 0 : index
    %c0_1 = arith.constant 0 : index
    %c0_2 = arith.constant 0 : index
    %3 = vector.load %arg4[%c0, %c0_1, %c0_2] : memref<1x8x32xf32, #tpu.memory_space<vmem>>, vector<1x8x32xf32>
    %4 = vector.shape_cast %3 : vector<1x8x32xf32> to vector<8x32xf32>
    %c0_3 = arith.constant 0 : index
    %c0_4 = arith.constant 0 : index
    %5 = vector.load %arg7[%c0_3, %c0_4] : memref<32x32xf32, #tpu.memory_space<vmem>>, vector<32x32xf32>
    %cst = arith.constant dense<0.000000e+00> : vector<8x32xf32>
    %6 = tpu.matmul %4, %5, %cst {dimension_numbers = #tpu.dot_dimension_numbers<[1], [0], [0], [1], [0, 0, 1, 1], [], []>} : vector<8x32xf32>, vector<32x32xf32>, vector<8x32xf32> -> vector<8x32xf32>
    %c0_5 = arith.constant 0 : index
    %c0_6 = arith.constant 0 : index
    %7 = vector.load %arg11[%c0_5, %c0_6] : memref<1x32xf32, #tpu.memory_space<vmem>>, vector<1x32xf32>
    %8 = vector.broadcast %7 : vector<1x32xf32> to vector<8x32xf32>
    %9 = arith.addf %6, %8 : vector<8x32xf32>
    %c0_7 = arith.constant 0 : index
    %c0_8 = arith.constant 0 : index
    %c0_9 = arith.constant 0 : index
    %10 = vector.load %arg5[%c0_7, %c0_8, %c0_9] : memref<1x8x32xf32, #tpu.memory_space<vmem>>, vector<1x8x32xf32>
    %11 = vector.shape_cast %10 : vector<1x8x32xf32> to vector<8x32xf32>
    %c0_10 = arith.constant 0 : index
    %c0_11 = arith.constant 0 : index
    %12 = vector.load %arg8[%c0_10, %c0_11] : memref<32x32xf32, #tpu.memory_space<vmem>>, vector<32x32xf32>
    %cst_12 = arith.constant dense<0.000000e+00> : vector<8x32xf32>
    %13 = tpu.matmul %11, %12, %cst_12 {dimension_numbers = #tpu.dot_dimension_numbers<[1], [0], [0], [1], [0, 0, 1, 1], [], []>} : vector<8x32xf32>, vector<32x32xf32>, vector<8x32xf32> -> vector<8x32xf32>
    %c0_13 = arith.constant 0 : index
    %c0_14 = arith.constant 0 : index
    %14 = vector.load %arg12[%c0_13, %c0_14] : memref<1x32xf32, #tpu.memory_space<vmem>>, vector<1x32xf32>
    %15 = vector.broadcast %14 : vector<1x32xf32> to vector<8x32xf32>
    %16 = arith.addf %13, %15 : vector<8x32xf32>
    %c0_15 = arith.constant 0 : index
    %c0_16 = arith.constant 0 : index
    %17 = vector.load %arg15[%c0_15, %c0_16] : memref<8x32xf32, #tpu.memory_space<vmem>>, vector<8x8xf32>
    %18 = vector.extract_strided_slice %9 {offsets = [0, 0], sizes = [8, 8], strides = [1, 1]} : vector<8x32xf32> to vector<8x8xf32>
    %19 = vector.extract_strided_slice %16 {offsets = [0, 0], sizes = [8, 8], strides = [1, 1]} : vector<8x32xf32> to vector<8x8xf32>
    %cst_17 = arith.constant dense<0.000000e+00> : vector<8x8xf32>
    %20 = tpu.matmul %17, %18, %cst_17 {dimension_numbers = #tpu.dot_dimension_numbers<[1], [1], [0], [0], [0, 0, 1, 0], [], []>} : vector<8x8xf32>, vector<8x8xf32>, vector<8x8xf32> -> vector<8x8xf32>
    %c0_18 = arith.constant 0 : index
    %c0_19 = arith.constant 0 : index
    %c0_20 = arith.constant 0 : index
    %21 = vector.load %arg16[%c0_18, %c0_19, %c0_20] : memref<4x8x1xf32, #tpu.memory_space<vmem>>, vector<1x8x1xf32>
    %22 = vector.shape_cast %21 : vector<1x8x1xf32> to vector<8x1xf32>
    %cst_21 = arith.constant dense<0xFF800000> : vector<8xf32>
    %23 = vector.multi_reduction <maximumf>, %20, %cst_21 [1] : vector<8x8xf32> to vector<8xf32>
    %24 = vector.shape_cast %23 : vector<8xf32> to vector<8x1xf32>
    %25 = arith.maximumf %22, %24 : vector<8x1xf32>
    %26 = arith.subf %22, %25 : vector<8x1xf32>
    %27 = math.exp %26 : vector<8x1xf32>
    %28 = vector.broadcast %25 : vector<8x1xf32> to vector<8x8xf32>
    %29 = arith.subf %20, %28 : vector<8x8xf32>
    %30 = math.exp %29 : vector<8x8xf32>
    %c0_22 = arith.constant 0 : index
    %c0_23 = arith.constant 0 : index
    %c0_24 = arith.constant 0 : index
    %31 = vector.load %arg17[%c0_22, %c0_23, %c0_24] : memref<4x8x1xf32, #tpu.memory_space<vmem>>, vector<1x8x1xf32>
    %32 = vector.shape_cast %31 : vector<1x8x1xf32> to vector<8x1xf32>
    %33 = arith.mulf %27, %32 : vector<8x1xf32>
    %cst_25 = arith.constant dense<0.000000e+00> : vector<8xf32>
    %34 = vector.multi_reduction <add>, %30, %cst_25 [1] : vector<8x8xf32> to vector<8xf32>
    %35 = vector.shape_cast %34 : vector<8xf32> to vector<8x1xf32>
    %36 = arith.addf %33, %35 : vector<8x1xf32>
    %c0_26 = arith.constant 0 : index
    %c0_27 = arith.constant 0 : index
    %c0_28 = arith.constant 0 : index
    %37 = vector.load %arg17[%c0_26, %c0_27, %c0_28] : memref<4x8x1xf32, #tpu.memory_space<vmem>>, vector<1x8x1xf32>
    %38 = vector.shape_cast %37 : vector<1x8x1xf32> to vector<8x1xf32>
    %39 = vector.shape_cast %36 : vector<8x1xf32> to vector<1x8x1xf32>
    tpu.vector_store %arg17[%c0_26, %c0_27, %c0_28], %39 {strides = array<i32>} : memref<4x8x1xf32, #tpu.memory_space<vmem>>, vector<1x8x1xf32>,
    %cst_29 = arith.constant dense<0.000000e+00> : vector<8x8xf32>
    %40 = tpu.matmul %30, %19, %cst_29 {dimension_numbers = #tpu.dot_dimension_numbers<[1], [0], [0], [1], [0, 0, 1, 1], [], []>} : vector<8x8xf32>, vector<8x8xf32>, vector<8x8xf32> -> vector<8x8xf32>
    %c0_30 = arith.constant 0 : index
    %c0_31 = arith.constant 0 : index
    %41 = vector.load %arg18[%c0_30, %c0_31] : memref<8x32xf32, #tpu.memory_space<vmem>>, vector<8x8xf32>
    %42 = vector.broadcast %27 : vector<8x1xf32> to vector<8x8xf32>
    %43 = arith.mulf %42, %41 : vector<8x8xf32>
    %44 = arith.addf %43, %40 : vector<8x8xf32>
    %c0_32 = arith.constant 0 : index
    %c0_33 = arith.constant 0 : index
    %45 = vector.load %arg18[%c0_32, %c0_33] : memref<8x32xf32, #tpu.memory_space<vmem>>, vector<8x8xf32>
    tpu.vector_store %arg18[%c0_32, %c0_33], %44 {strides = array<i32>} : memref<8x32xf32, #tpu.memory_space<vmem>>, vector<8x8xf32>,
    %c0_34 = arith.constant 0 : index
    %c0_35 = arith.constant 0 : index
    %c0_36 = arith.constant 0 : index
    %46 = vector.load %arg16[%c0_34, %c0_35, %c0_36] : memref<4x8x1xf32, #tpu.memory_space<vmem>>, vector<1x8x1xf32>
    %47 = vector.shape_cast %46 : vector<1x8x1xf32> to vector<8x1xf32>
    %48 = vector.shape_cast %25 : vector<8x1xf32> to vector<1x8x1xf32>
    tpu.vector_store %arg16[%c0_34, %c0_35, %c0_36], %48 {strides = array<i32>} : memref<4x8x1xf32, #tpu.memory_space<vmem>>, vector<1x8x1xf32>,
    %c0_37 = arith.constant 0 : index
    %c8 = arith.constant 8 : index
    %49 = vector.load %arg15[%c0_37, %c8] : memref<8x32xf32, #tpu.memory_space<vmem>>, vector<8x8xf32>
    %50 = vector.extract_strided_slice %9 {offsets = [0, 8], sizes = [8, 8], strides = [1, 1]} : vector<8x32xf32> to vector<8x8xf32>
    %51 = vector.extract_strided_slice %16 {offsets = [0, 8], sizes = [8, 8], strides = [1, 1]} : vector<8x32xf32> to vector<8x8xf32>
    %cst_38 = arith.constant dense<0.000000e+00> : vector<8x8xf32>
    %52 = tpu.matmul %49, %50, %cst_38 {dimension_numbers = #tpu.dot_dimension_numbers<[1], [1], [0], [0], [0, 0, 1, 0], [], []>} : vector<8x8xf32>, vector<8x8xf32>, vector<8x8xf32> -> vector<8x8xf32>
    %c1 = arith.constant 1 : index
    %c0_39 = arith.constant 0 : index
    %c0_40 = arith.constant 0 : index
    %53 = vector.load %arg16[%c1, %c0_39, %c0_40] : memref<4x8x1xf32, #tpu.memory_space<vmem>>, vector<1x8x1xf32>
    %54 = vector.shape_cast %53 : vector<1x8x1xf32> to vector<8x1xf32>
    %cst_41 = arith.constant dense<0xFF800000> : vector<8xf32>
    %55 = vector.multi_reduction <maximumf>, %52, %cst_41 [1] : vector<8x8xf32> to vector<8xf32>
    %56 = vector.shape_cast %55 : vector<8xf32> to vector<8x1xf32>
    %57 = arith.maximumf %54, %56 : vector<8x1xf32>
    %58 = arith.subf %54, %57 : vector<8x1xf32>
    %59 = math.exp %58 : vector<8x1xf32>
    %60 = vector.broadcast %57 : vector<8x1xf32> to vector<8x8xf32>
    %61 = arith.subf %52, %60 : vector<8x8xf32>
    %62 = math.exp %61 : vector<8x8xf32>
    %c1_42 = arith.constant 1 : index
    %c0_43 = arith.constant 0 : index
    %c0_44 = arith.constant 0 : index
    %63 = vector.load %arg17[%c1_42, %c0_43, %c0_44] : memref<4x8x1xf32, #tpu.memory_space<vmem>>, vector<1x8x1xf32>
    %64 = vector.shape_cast %63 : vector<1x8x1xf32> to vector<8x1xf32>
    %65 = arith.mulf %59, %64 : vector<8x1xf32>
    %cst_45 = arith.constant dense<0.000000e+00> : vector<8xf32>
    %66 = vector.multi_reduction <add>, %62, %cst_45 [1] : vector<8x8xf32> to vector<8xf32>
    %67 = vector.shape_cast %66 : vector<8xf32> to vector<8x1xf32>
    %68 = arith.addf %65, %67 : vector<8x1xf32>
    %c1_46 = arith.constant 1 : index
    %c0_47 = arith.constant 0 : index
    %c0_48 = arith.constant 0 : index
    %69 = vector.load %arg17[%c1_46, %c0_47, %c0_48] : memref<4x8x1xf32, #tpu.memory_space<vmem>>, vector<1x8x1xf32>
    %70 = vector.shape_cast %69 : vector<1x8x1xf32> to vector<8x1xf32>
    %71 = vector.shape_cast %68 : vector<8x1xf32> to vector<1x8x1xf32>
    tpu.vector_store %arg17[%c1_46, %c0_47, %c0_48], %71 {strides = array<i32>} : memref<4x8x1xf32, #tpu.memory_space<vmem>>, vector<1x8x1xf32>,
    %cst_49 = arith.constant dense<0.000000e+00> : vector<8x8xf32>
    %72 = tpu.matmul %62, %51, %cst_49 {dimension_numbers = #tpu.dot_dimension_numbers<[1], [0], [0], [1], [0, 0, 1, 1], [], []>} : vector<8x8xf32>, vector<8x8xf32>, vector<8x8xf32> -> vector<8x8xf32>
    %c0_50 = arith.constant 0 : index
    %c8_51 = arith.constant 8 : index
    %73 = vector.load %arg18[%c0_50, %c8_51] : memref<8x32xf32, #tpu.memory_space<vmem>>, vector<8x8xf32>
    %74 = vector.broadcast %59 : vector<8x1xf32> to vector<8x8xf32>
    %75 = arith.mulf %74, %73 : vector<8x8xf32>
    %76 = arith.addf %75, %72 : vector<8x8xf32>
    %c0_52 = arith.constant 0 : index
    %c8_53 = arith.constant 8 : index
    %77 = vector.load %arg18[%c0_52, %c8_53] : memref<8x32xf32, #tpu.memory_space<vmem>>, vector<8x8xf32>
    tpu.vector_store %arg18[%c0_52, %c8_53], %76 {strides = array<i32>} : memref<8x32xf32, #tpu.memory_space<vmem>>, vector<8x8xf32>,
    %c1_54 = arith.constant 1 : index
    %c0_55 = arith.constant 0 : index
    %c0_56 = arith.constant 0 : index
    %78 = vector.load %arg16[%c1_54, %c0_55, %c0_56] : memref<4x8x1xf32, #tpu.memory_space<vmem>>, vector<1x8x1xf32>
    %79 = vector.shape_cast %78 : vector<1x8x1xf32> to vector<8x1xf32>
    %80 = vector.shape_cast %57 : vector<8x1xf32> to vector<1x8x1xf32>
    tpu.vector_store %arg16[%c1_54, %c0_55, %c0_56], %80 {strides = array<i32>} : memref<4x8x1xf32, #tpu.memory_space<vmem>>, vector<1x8x1xf32>,
    %c0_57 = arith.constant 0 : index
    %c16 = arith.constant 16 : index
    %81 = vector.load %arg15[%c0_57, %c16] : memref<8x32xf32, #tpu.memory_space<vmem>>, vector<8x8xf32>
    %82 = vector.extract_strided_slice %9 {offsets = [0, 16], sizes = [8, 8], strides = [1, 1]} : vector<8x32xf32> to vector<8x8xf32>
    %83 = vector.extract_strided_slice %16 {offsets = [0, 16], sizes = [8, 8], strides = [1, 1]} : vector<8x32xf32> to vector<8x8xf32>
    %cst_58 = arith.constant dense<0.000000e+00> : vector<8x8xf32>
    %84 = tpu.matmul %81, %82, %cst_58 {dimension_numbers = #tpu.dot_dimension_numbers<[1], [1], [0], [0], [0, 0, 1, 0], [], []>} : vector<8x8xf32>, vector<8x8xf32>, vector<8x8xf32> -> vector<8x8xf32>
    %c2 = arith.constant 2 : index
    %c0_59 = arith.constant 0 : index
    %c0_60 = arith.constant 0 : index
    %85 = vector.load %arg16[%c2, %c0_59, %c0_60] : memref<4x8x1xf32, #tpu.memory_space<vmem>>, vector<1x8x1xf32>
    %86 = vector.shape_cast %85 : vector<1x8x1xf32> to vector<8x1xf32>
    %cst_61 = arith.constant dense<0xFF800000> : vector<8xf32>
    %87 = vector.multi_reduction <maximumf>, %84, %cst_61 [1] : vector<8x8xf32> to vector<8xf32>
    %88 = vector.shape_cast %87 : vector<8xf32> to vector<8x1xf32>
    %89 = arith.maximumf %86, %88 : vector<8x1xf32>
    %90 = arith.subf %86, %89 : vector<8x1xf32>
    %91 = math.exp %90 : vector<8x1xf32>
    %92 = vector.broadcast %89 : vector<8x1xf32> to vector<8x8xf32>
    %93 = arith.subf %84, %92 : vector<8x8xf32>
    %94 = math.exp %93 : vector<8x8xf32>
    %c2_62 = arith.constant 2 : index
    %c0_63 = arith.constant 0 : index
    %c0_64 = arith.constant 0 : index
    %95 = vector.load %arg17[%c2_62, %c0_63, %c0_64] : memref<4x8x1xf32, #tpu.memory_space<vmem>>, vector<1x8x1xf32>
    %96 = vector.shape_cast %95 : vector<1x8x1xf32> to vector<8x1xf32>
    %97 = arith.mulf %91, %96 : vector<8x1xf32>
    %cst_65 = arith.constant dense<0.000000e+00> : vector<8xf32>
    %98 = vector.multi_reduction <add>, %94, %cst_65 [1] : vector<8x8xf32> to vector<8xf32>
    %99 = vector.shape_cast %98 : vector<8xf32> to vector<8x1xf32>
    %100 = arith.addf %97, %99 : vector<8x1xf32>
    %c2_66 = arith.constant 2 : index
    %c0_67 = arith.constant 0 : index
    %c0_68 = arith.constant 0 : index
    %101 = vector.load %arg17[%c2_66, %c0_67, %c0_68] : memref<4x8x1xf32, #tpu.memory_space<vmem>>, vector<1x8x1xf32>
    %102 = vector.shape_cast %101 : vector<1x8x1xf32> to vector<8x1xf32>
    %103 = vector.shape_cast %100 : vector<8x1xf32> to vector<1x8x1xf32>
    tpu.vector_store %arg17[%c2_66, %c0_67, %c0_68], %103 {strides = array<i32>} : memref<4x8x1xf32, #tpu.memory_space<vmem>>, vector<1x8x1xf32>,
    %cst_69 = arith.constant dense<0.000000e+00> : vector<8x8xf32>
    %104 = tpu.matmul %94, %83, %cst_69 {dimension_numbers = #tpu.dot_dimension_numbers<[1], [0], [0], [1], [0, 0, 1, 1], [], []>} : vector<8x8xf32>, vector<8x8xf32>, vector<8x8xf32> -> vector<8x8xf32>
    %c0_70 = arith.constant 0 : index
    %c16_71 = arith.constant 16 : index
    %105 = vector.load %arg18[%c0_70, %c16_71] : memref<8x32xf32, #tpu.memory_space<vmem>>, vector<8x8xf32>
    %106 = vector.broadcast %91 : vector<8x1xf32> to vector<8x8xf32>
    %107 = arith.mulf %106, %105 : vector<8x8xf32>
    %108 = arith.addf %107, %104 : vector<8x8xf32>
    %c0_72 = arith.constant 0 : index
    %c16_73 = arith.constant 16 : index
    %109 = vector.load %arg18[%c0_72, %c16_73] : memref<8x32xf32, #tpu.memory_space<vmem>>, vector<8x8xf32>
    tpu.vector_store %arg18[%c0_72, %c16_73], %108 {strides = array<i32>} : memref<8x32xf32, #tpu.memory_space<vmem>>, vector<8x8xf32>,
    %c2_74 = arith.constant 2 : index
    %c0_75 = arith.constant 0 : index
    %c0_76 = arith.constant 0 : index
    %110 = vector.load %arg16[%c2_74, %c0_75, %c0_76] : memref<4x8x1xf32, #tpu.memory_space<vmem>>, vector<1x8x1xf32>
    %111 = vector.shape_cast %110 : vector<1x8x1xf32> to vector<8x1xf32>
    %112 = vector.shape_cast %89 : vector<8x1xf32> to vector<1x8x1xf32>
    tpu.vector_store %arg16[%c2_74, %c0_75, %c0_76], %112 {strides = array<i32>} : memref<4x8x1xf32, #tpu.memory_space<vmem>>, vector<1x8x1xf32>,
    %c0_77 = arith.constant 0 : index
    %c24 = arith.constant 24 : index
    %113 = vector.load %arg15[%c0_77, %c24] : memref<8x32xf32, #tpu.memory_space<vmem>>, vector<8x8xf32>
    %114 = vector.extract_strided_slice %9 {offsets = [0, 24], sizes = [8, 8], strides = [1, 1]} : vector<8x32xf32> to vector<8x8xf32>
    %115 = vector.extract_strided_slice %16 {offsets = [0, 24], sizes = [8, 8], strides = [1, 1]} : vector<8x32xf32> to vector<8x8xf32>
    %cst_78 = arith.constant dense<0.000000e+00> : vector<8x8xf32>
    %116 = tpu.matmul %113, %114, %cst_78 {dimension_numbers = #tpu.dot_dimension_numbers<[1], [1], [0], [0], [0, 0, 1, 0], [], []>} : vector<8x8xf32>, vector<8x8xf32>, vector<8x8xf32> -> vector<8x8xf32>
    %c3 = arith.constant 3 : index
    %c0_79 = arith.constant 0 : index
    %c0_80 = arith.constant 0 : index
    %117 = vector.load %arg16[%c3, %c0_79, %c0_80] : memref<4x8x1xf32, #tpu.memory_space<vmem>>, vector<1x8x1xf32>
    %118 = vector.shape_cast %117 : vector<1x8x1xf32> to vector<8x1xf32>
    %cst_81 = arith.constant dense<0xFF800000> : vector<8xf32>
    %119 = vector.multi_reduction <maximumf>, %116, %cst_81 [1] : vector<8x8xf32> to vector<8xf32>
    %120 = vector.shape_cast %119 : vector<8xf32> to vector<8x1xf32>
    %121 = arith.maximumf %118, %120 : vector<8x1xf32>
    %122 = arith.subf %118, %121 : vector<8x1xf32>
    %123 = math.exp %122 : vector<8x1xf32>
    %124 = vector.broadcast %121 : vector<8x1xf32> to vector<8x8xf32>
    %125 = arith.subf %116, %124 : vector<8x8xf32>
    %126 = math.exp %125 : vector<8x8xf32>
    %c3_82 = arith.constant 3 : index
    %c0_83 = arith.constant 0 : index
    %c0_84 = arith.constant 0 : index
    %127 = vector.load %arg17[%c3_82, %c0_83, %c0_84] : memref<4x8x1xf32, #tpu.memory_space<vmem>>, vector<1x8x1xf32>
    %128 = vector.shape_cast %127 : vector<1x8x1xf32> to vector<8x1xf32>
    %129 = arith.mulf %123, %128 : vector<8x1xf32>
    %cst_85 = arith.constant dense<0.000000e+00> : vector<8xf32>
    %130 = vector.multi_reduction <add>, %126, %cst_85 [1] : vector<8x8xf32> to vector<8xf32>
    %131 = vector.shape_cast %130 : vector<8xf32> to vector<8x1xf32>
    %132 = arith.addf %129, %131 : vector<8x1xf32>
    %c3_86 = arith.constant 3 : index
    %c0_87 = arith.constant 0 : index
    %c0_88 = arith.constant 0 : index
    %133 = vector.load %arg17[%c3_86, %c0_87, %c0_88] : memref<4x8x1xf32, #tpu.memory_space<vmem>>, vector<1x8x1xf32>
    %134 = vector.shape_cast %133 : vector<1x8x1xf32> to vector<8x1xf32>
    %135 = vector.shape_cast %132 : vector<8x1xf32> to vector<1x8x1xf32>
    tpu.vector_store %arg17[%c3_86, %c0_87, %c0_88], %135 {strides = array<i32>} : memref<4x8x1xf32, #tpu.memory_space<vmem>>, vector<1x8x1xf32>,
    %cst_89 = arith.constant dense<0.000000e+00> : vector<8x8xf32>
    %136 = tpu.matmul %126, %115, %cst_89 {dimension_numbers = #tpu.dot_dimension_numbers<[1], [0], [0], [1], [0, 0, 1, 1], [], []>} : vector<8x8xf32>, vector<8x8xf32>, vector<8x8xf32> -> vector<8x8xf32>
    %c0_90 = arith.constant 0 : index
    %c24_91 = arith.constant 24 : index
    %137 = vector.load %arg18[%c0_90, %c24_91] : memref<8x32xf32, #tpu.memory_space<vmem>>, vector<8x8xf32>
    %138 = vector.broadcast %123 : vector<8x1xf32> to vector<8x8xf32>
    %139 = arith.mulf %138, %137 : vector<8x8xf32>
    %140 = arith.addf %139, %136 : vector<8x8xf32>
    %c0_92 = arith.constant 0 : index
    %c24_93 = arith.constant 24 : index
    %141 = vector.load %arg18[%c0_92, %c24_93] : memref<8x32xf32, #tpu.memory_space<vmem>>, vector<8x8xf32>
    tpu.vector_store %arg18[%c0_92, %c24_93], %140 {strides = array<i32>} : memref<8x32xf32, #tpu.memory_space<vmem>>, vector<8x8xf32>,
    %c3_94 = arith.constant 3 : index
    %c0_95 = arith.constant 0 : index
    %c0_96 = arith.constant 0 : index
    %142 = vector.load %arg16[%c3_94, %c0_95, %c0_96] : memref<4x8x1xf32, #tpu.memory_space<vmem>>, vector<1x8x1xf32>
    %143 = vector.shape_cast %142 : vector<1x8x1xf32> to vector<8x1xf32>
    %144 = vector.shape_cast %121 : vector<8x1xf32> to vector<1x8x1xf32>
    tpu.vector_store %arg16[%c3_94, %c0_95, %c0_96], %144 {strides = array<i32>} : memref<4x8x1xf32, #tpu.memory_space<vmem>>, vector<1x8x1xf32>,
    %c0_i32_97 = arith.constant 0 : i32
    %145 = arith.cmpi eq, %arg2, %c0_i32_97 : i32
    %146 = arith.extui %145 : i1 to i32
    %c0_i32_98 = arith.constant 0 : i32
    %147 = arith.cmpi ne, %146, %c0_i32_98 : i32
    scf.if %147 {
      %c0_99 = arith.constant 0 : index
      %c0_100 = arith.constant 0 : index
      %c0_101 = arith.constant 0 : index
      %148 = vector.load %arg17[%c0_99, %c0_100, %c0_101] : memref<4x8x1xf32, #tpu.memory_space<vmem>>, vector<4x8x1xf32>
      %149 = tpu.reciprocal %148 : vector<4x8x1xf32> -> vector<4x8x1xf32>
      %c0_102 = arith.constant 0 : index
      %c0_103 = arith.constant 0 : index
      %150 = vector.load %arg18[%c0_102, %c0_103] : memref<8x32xf32, #tpu.memory_space<vmem>>, vector<8x8xf32>
      %151 = vector.extract_strided_slice %149 {offsets = [0, 0, 0], sizes = [1, 8, 1], strides = [1, 1, 1]} : vector<4x8x1xf32> to vector<1x8x1xf32>
      %152 = vector.shape_cast %151 : vector<1x8x1xf32> to vector<8x1xf32>
      %153 = vector.broadcast %152 : vector<8x1xf32> to vector<8x8xf32>
      %154 = arith.mulf %150, %153 : vector<8x8xf32>
      %c0_104 = arith.constant 0 : index
      %c0_105 = arith.constant 0 : index
      %155 = vector.load %arg18[%c0_104, %c0_105] : memref<8x32xf32, #tpu.memory_space<vmem>>, vector<8x8xf32>
      tpu.vector_store %arg18[%c0_104, %c0_105], %154 {strides = array<i32>} : memref<8x32xf32, #tpu.memory_space<vmem>>, vector<8x8xf32>,
      %c0_106 = arith.constant 0 : index
      %c8_107 = arith.constant 8 : index
      %156 = vector.load %arg18[%c0_106, %c8_107] : memref<8x32xf32, #tpu.memory_space<vmem>>, vector<8x8xf32>
      %157 = vector.extract_strided_slice %149 {offsets = [1, 0, 0], sizes = [1, 8, 1], strides = [1, 1, 1]} : vector<4x8x1xf32> to vector<1x8x1xf32>
      %158 = vector.shape_cast %157 : vector<1x8x1xf32> to vector<8x1xf32>
      %159 = vector.broadcast %158 : vector<8x1xf32> to vector<8x8xf32>
      %160 = arith.mulf %156, %159 : vector<8x8xf32>
      %c0_108 = arith.constant 0 : index
      %c8_109 = arith.constant 8 : index
      %161 = vector.load %arg18[%c0_108, %c8_109] : memref<8x32xf32, #tpu.memory_space<vmem>>, vector<8x8xf32>
      tpu.vector_store %arg18[%c0_108, %c8_109], %160 {strides = array<i32>} : memref<8x32xf32, #tpu.memory_space<vmem>>, vector<8x8xf32>,
      %c0_110 = arith.constant 0 : index
      %c16_111 = arith.constant 16 : index
      %162 = vector.load %arg18[%c0_110, %c16_111] : memref<8x32xf32, #tpu.memory_space<vmem>>, vector<8x8xf32>
      %163 = vector.extract_strided_slice %149 {offsets = [2, 0, 0], sizes = [1, 8, 1], strides = [1, 1, 1]} : vector<4x8x1xf32> to vector<1x8x1xf32>
      %164 = vector.shape_cast %163 : vector<1x8x1xf32> to vector<8x1xf32>
      %165 = vector.broadcast %164 : vector<8x1xf32> to vector<8x8xf32>
      %166 = arith.mulf %162, %165 : vector<8x8xf32>
      %c0_112 = arith.constant 0 : index
      %c16_113 = arith.constant 16 : index
      %167 = vector.load %arg18[%c0_112, %c16_113] : memref<8x32xf32, #tpu.memory_space<vmem>>, vector<8x8xf32>
      tpu.vector_store %arg18[%c0_112, %c16_113], %166 {strides = array<i32>} : memref<8x32xf32, #tpu.memory_space<vmem>>, vector<8x8xf32>,
      %c0_114 = arith.constant 0 : index
      %c24_115 = arith.constant 24 : index
      %168 = vector.load %arg18[%c0_114, %c24_115] : memref<8x32xf32, #tpu.memory_space<vmem>>, vector<8x8xf32>
      %169 = vector.extract_strided_slice %149 {offsets = [3, 0, 0], sizes = [1, 8, 1], strides = [1, 1, 1]} : vector<4x8x1xf32> to vector<1x8x1xf32>
      %170 = vector.shape_cast %169 : vector<1x8x1xf32> to vector<8x1xf32>
      %171 = vector.broadcast %170 : vector<8x1xf32> to vector<8x8xf32>
      %172 = arith.mulf %168, %171 : vector<8x8xf32>
      %c0_116 = arith.constant 0 : index
      %c24_117 = arith.constant 24 : index
      %173 = vector.load %arg18[%c0_116, %c24_117] : memref<8x32xf32, #tpu.memory_space<vmem>>, vector<8x8xf32>
      tpu.vector_store %arg18[%c0_116, %c24_117], %172 {strides = array<i32>} : memref<8x32xf32, #tpu.memory_space<vmem>>, vector<8x8xf32>,
      %c0_118 = arith.constant 0 : index
      %c0_119 = arith.constant 0 : index
      %174 = vector.load %arg18[%c0_118, %c0_119] : memref<8x32xf32, #tpu.memory_space<vmem>>, vector<8x32xf32>
      %c0_120 = arith.constant 0 : index
      %c0_121 = arith.constant 0 : index
      %175 = vector.load %arg9[%c0_120, %c0_121] : memref<32x32xf32, #tpu.memory_space<vmem>>, vector<32x32xf32>
      %cst_122 = arith.constant dense<0.000000e+00> : vector<8x32xf32>
      %176 = tpu.matmul %174, %175, %cst_122 {dimension_numbers = #tpu.dot_dimension_numbers<[1], [0], [0], [1], [0, 0, 1, 1], [], []>} : vector<8x32xf32>, vector<32x32xf32>, vector<8x32xf32> -> vector<8x32xf32>
      %c0_123 = arith.constant 0 : index
      %c0_124 = arith.constant 0 : index
      %177 = vector.load %arg13[%c0_123, %c0_124] : memref<1x32xf32, #tpu.memory_space<vmem>>, vector<1x32xf32>
      %178 = vector.broadcast %177 : vector<1x32xf32> to vector<8x32xf32>
      %179 = arith.addf %176, %178 : vector<8x32xf32>
      %c0_125 = arith.constant 0 : index
      %c0_126 = arith.constant 0 : index
      %c0_127 = arith.constant 0 : index
      %180 = vector.load %arg14[%c0_125, %c0_126, %c0_127] : memref<1x8x32xf32, #tpu.memory_space<vmem>>, vector<1x8x32xf32>
      %181 = vector.shape_cast %180 : vector<1x8x32xf32> to vector<8x32xf32>
      %182 = vector.shape_cast %179 : vector<8x32xf32> to vector<1x8x32xf32>
      tpu.vector_store %arg14[%c0_125, %c0_126, %c0_127], %182 {strides = array<i32>} : memref<1x8x32xf32, #tpu.memory_space<vmem>>, vector<1x8x32xf32>,
    } else {
    }
    return
  }
  func.func @transform_0(%arg0: i32, %arg1: i32, %arg2: i32) -> (i32, i32, i32) {
    %c0_i32 = arith.constant 0 : i32
    %c0_i32_0 = arith.constant 0 : i32
    return %arg0, %arg1, %c0_i32 : i32, i32, i32
  }
  func.func @transform_1(%arg0: i32, %arg1: i32, %arg2: i32) -> (i32, i32, i32) {
    %c0_i32 = arith.constant 0 : i32
    %c0_i32_0 = arith.constant 0 : i32
    return %arg0, %arg2, %c0_i32 : i32, i32, i32
  }
  func.func @transform_2(%arg0: i32, %arg1: i32, %arg2: i32) -> (i32, i32, i32) {
    %c0_i32 = arith.constant 0 : i32
    %c0_i32_0 = arith.constant 0 : i32
    return %arg0, %arg2, %c0_i32 : i32, i32, i32
  }
  func.func @transform_3(%arg0: i32, %arg1: i32, %arg2: i32) -> (i32, i32) {
    %c0_i32 = arith.constant 0 : i32
    %c0_i32_0 = arith.constant 0 : i32
    %c0_i32_1 = arith.constant 0 : i32
    return %c0_i32, %c0_i32_0 : i32, i32
  }
  func.func @transform_4(%arg0: i32, %arg1: i32, %arg2: i32) -> (i32, i32) {
    %c0_i32 = arith.constant 0 : i32
    %c0_i32_0 = arith.constant 0 : i32
    %c0_i32_1 = arith.constant 0 : i32
    return %c0_i32, %c0_i32_0 : i32, i32
  }
  func.func @transform_5(%arg0: i32, %arg1: i32, %arg2: i32) -> (i32, i32) {
    %c0_i32 = arith.constant 0 : i32
    %c0_i32_0 = arith.constant 0 : i32
    %c0_i32_1 = arith.constant 0 : i32
    return %c0_i32, %c0_i32_0 : i32, i32
  }
  func.func @transform_6(%arg0: i32, %arg1: i32, %arg2: i32) -> (i32, i32) {
    %c0_i32 = arith.constant 0 : i32
    %c0_i32_0 = arith.constant 0 : i32
    %c0_i32_1 = arith.constant 0 : i32
    return %c0_i32, %c0_i32_0 : i32, i32
  }
  func.func @transform_7(%arg0: i32, %arg1: i32, %arg2: i32) -> (i32, i32) {
    %c0_i32 = arith.constant 0 : i32
    %c0_i32_0 = arith.constant 0 : i32
    %c0_i32_1 = arith.constant 0 : i32
    return %c0_i32, %c0_i32_0 : i32, i32
  }
  func.func @transform_8(%arg0: i32, %arg1: i32, %arg2: i32) -> (i32, i32) {
    %c0_i32 = arith.constant 0 : i32
    %c0_i32_0 = arith.constant 0 : i32
    %c0_i32_1 = arith.constant 0 : i32
    return %c0_i32, %c0_i32_0 : i32, i32
  }
  func.func @transform_9(%arg0: i32, %arg1: i32, %arg2: i32) -> (i32, i32) {
    %c0_i32 = arith.constant 0 : i32
    %c0_i32_0 = arith.constant 0 : i32
    %c0_i32_1 = arith.constant 0 : i32
    return %c0_i32, %c0_i32_0 : i32, i32
  }
  func.func @transform_10(%arg0: i32, %arg1: i32, %arg2: i32) -> (i32, i32) {
    %c0_i32 = arith.constant 0 : i32
    %c0_i32_0 = arith.constant 0 : i32
    %c0_i32_1 = arith.constant 0 : i32
    return %c0_i32, %c0_i32_0 : i32, i32
  }
  func.func @transform_11(%arg0: i32, %arg1: i32, %arg2: i32) -> (i32, i32, i32) {
    %c0_i32 = arith.constant 0 : i32
    %c0_i32_0 = arith.constant 0 : i32
    return %arg0, %arg1, %c0_i32 : i32, i32, i32
  }
}

</mosaic_0001>

<llo_original>
// kernel: tpu_custom_call.1
$region0: #{tpu_custom_call.1}
  #allocation0 [shape = 'u32[]', space=smem, size = 0x4, offset = 0x4, fixed_abs, tag = 'smem constant byte address 0x4 - core index']
  #allocation1 [shape = 'u32[144,128]{1,0:T(1,128)}', space=vmem, size = 0x12000, scoped, tag = 'internal scratch']
  #allocation2 [shape = 'f32[8,32]{1,0:T(8,128)}', space=vmem, size = 0x1000, scoped, tag = 'scratch operand']
  #allocation3 [shape = 'f32[4,8,1]{2,1,0:T(8,128)}', space=vmem, size = 0x4000, scoped, tag = 'scratch operand']
  #allocation4 [shape = 'f32[4,8,1]{2,1,0:T(8,128)}', space=vmem, size = 0x4000, scoped, tag = 'scratch operand']
  #allocation5 [shape = 'f32[8,32]{1,0:T(8,128)}', space=vmem, size = 0x1000, scoped, tag = 'scratch operand']
  %s0 = inlined_call_operand.hbm [shape: f32[2,8,32], index: 0, kind: input, shape index: {}]
  %s1 = inlined_call_operand.hbm [shape: f32[2,8,32], index: 1, kind: input, shape index: {}]
  %s2 = inlined_call_operand.hbm [shape: f32[2,8,32], index: 2, kind: input, shape index: {}]
  %s3 = inlined_call_operand.hbm [shape: f32[32,32], index: 3, kind: input, shape index: {}]
  %s4 = inlined_call_operand.hbm [shape: f32[32,32], index: 4, kind: input, shape index: {}]
  %s5 = inlined_call_operand.hbm [shape: f32[32,32], index: 5, kind: input, shape index: {}]
  %s6 = inlined_call_operand.hbm [shape: f32[32,32], index: 6, kind: input, shape index: {}]
  %s7 = inlined_call_operand.vmem [shape: f32[1,32], index: 7, kind: input, shape index: {}]
  %s8 = inlined_call_operand.vmem [shape: f32[1,32], index: 8, kind: input, shape index: {}]
  %s9 = inlined_call_operand.vmem [shape: f32[1,32], index: 9, kind: input, shape index: {}]
  %s10 = inlined_call_operand.vmem [shape: f32[1,32], index: 10, kind: input, shape index: {}]
  %s11 = inlined_call_operand.hbm [shape: f32[2,8,32], index: 11, kind: output, shape index: {}]
  %s12 = sld [smem:[#allocation0]]
  $region113: #{tpu_custom_call.1} parent=0
    _
  %s14 = ssub.s32 1, %s12
  %s15 = scalar_select 0, %s14, %s12
  $region1: #{tpu_custom_call.1} parent=0
    #allocation6 [shape = 'u8[8192]{0}', space=vmem, size = 0x2000, scoped, tag = 'input window, operand 0']
    #allocation7 [shape = 's32[2]{0}', space=sflag, size = 0x8, scoped, tag = 'scoped memory for tpu_custom_call.1']
    #allocation8 [shape = 's32[2]{0}', space=sflag, size = 0x8, scoped, tag = 'scoped memory for tpu_custom_call.1']
    #allocation9 [shape = 'u8[8192]{0}', space=vmem, size = 0x2000, scoped, tag = 'input window, operand 1']
    #allocation10 [shape = 's32[2]{0}', space=sflag, size = 0x8, scoped, tag = 'scoped memory for tpu_custom_call.1']
    #allocation11 [shape = 'u8[8192]{0}', space=vmem, size = 0x2000, scoped, tag = 'input window, operand 2']
    #allocation12 [shape = 'u8[16384]{0}', space=vmem, size = 0x4000, scoped, tag = 'input window, operand 3, single buffered']
    #allocation13 [shape = 's32[1]{0}', space=sflag, size = 0x4, scoped, tag = 'scoped memory for tpu_custom_call.1']
    #allocation14 [shape = 'u8[16384]{0}', space=vmem, size = 0x4000, scoped, tag = 'input window, operand 4, single buffered']
    #allocation15 [shape = 'u8[16384]{0}', space=vmem, size = 0x4000, scoped, tag = 'input window, operand 5, single buffered']
    #allocation16 [shape = 's32[1]{0}', space=sflag, size = 0x4, scoped, tag = 'scoped memory for tpu_custom_call.1']
    #allocation17 [shape = 'u8[16384]{0}', space=vmem, size = 0x4000, scoped, tag = 'input window, operand 6, single buffered']
    #allocation18 [shape = 'u8[8192]{0}', space=vmem, size = 0x2000, scoped, tag = 'output window, operand 0']
    %16 = vsyncpa [#allocation7], 0
    %s17 = scalar_lea.sflag [#allocation7], 1
    %18 = vsyncpa %s17, 0
    %19 = vsyncpa [#allocation10], 0
    %s20 = scalar_lea.sflag [#allocation10], 1
    %21 = vsyncpa %s20, 0
    %22 = vsyncpa [#allocation13], 0
    %23 = vsyncpa [#allocation16], 0
    %24 = vsyncpa [#allocation8], 0
    %s25 = scalar_lea.sflag [#allocation8], 1
    %26 = vsyncpa %s25, 0
    loop: start=0, step=1, limit=4
    $region2: #{tpu_custom_call.1} parent=1 // loop_pre_header
      _
    $region3: #{tpu_custom_call.1} parent=1 // loop_header
      %s28 = sphi 0, %s32
      %p29 = scmp.ge.s32.totalorder %s28, 4
      %s35 = sphi 0, %s54
      %s36 = sphi 0, %s50
      %s37 = sphi 0, %s46
      %s38 = sphi 0, %s35
      %s39 = sphi 0, %s36
      %s40 = sphi 0, %s37
      %s41 = sphi 0, %s38
      %s42 = sphi 0, %s39
      %s43 = sphi 0, %s40
      %s59 = sphi 0, %s61
      %s62 = sphi 0, %s59
      %s63 = sphi 0, %s62
      %s79 = sphi 0, %s63
      %s87 = sphi 0, %s89
      %s90 = sphi 0, %s87
      %s91 = sphi 0, %s90
      %s107 = sphi 0, %s91
      %s115 = sphi 0, %s117
      %s118 = sphi 0, %s115
      %s119 = sphi 0, %s118
      %s135 = sphi 0, %s119
      %s139 = sphi 0, %s139
      %s141 = sphi 0, %s139
      %s142 = sphi 0, %s141
      %s156 = sphi 0, %s142
      %s160 = sphi 0, %s160
      %s162 = sphi 0, %s160
      %s163 = sphi 0, %s162
      %s177 = sphi 0, %s163
      %s181 = sphi 0, %s181
      %s183 = sphi 0, %s181
      %s184 = sphi 0, %s183
      %s198 = sphi 0, %s184
      %s202 = sphi 0, %s202
      %s204 = sphi 0, %s202
      %s205 = sphi 0, %s204
      %s219 = sphi 0, %s205
      %s223 = sphi 0, %s223
      %s225 = sphi 0, %s223
      %s226 = sphi 0, %s225
      %s240 = sphi 0, %s226
      %s244 = sphi 0, %s244
      %s246 = sphi 0, %s244
      %s247 = sphi 0, %s246
      %s261 = sphi 0, %s247
      %s265 = sphi 0, %s265
      %s267 = sphi 0, %s265
      %s268 = sphi 0, %s267
      %s282 = sphi 0, %s268
      %s286 = sphi 0, %s286
      %s288 = sphi 0, %s286
      %s289 = sphi 0, %s288
      %s303 = sphi 0, %s289
      %s311 = sphi 0, %s313
      %s314 = sphi 0, %s311
      %s315 = sphi 0, %s314
      %s331 = sphi 0, %s315
    $region4: #{tpu_custom_call.1} parent=1 // loop_header_branch
      %31 = sbr.rel (%p29) target = $region8
    $region5: #{tpu_custom_call.1} parent=1 // loop_body
      %s33 = ssub.s32 %s28, 1
      %s34 = ssub.s32 %s28, 2
      %s44 = sadd.s32 1, %s37
      %p45 = scmp.ge.s32.totalorder %s44, 1
      %s46 = scalar_select %p45, 0, %s44
      %s47 = sadd.s32 1, %s36
      %s48 = scalar_select %p45, %s47, %s36
      %p49 = scmp.ge.s32.totalorder %s48, 1
      %s50 = scalar_select %p49, 0, %s48
      %s51 = sadd.s32 1, %s35
      %s52 = scalar_select %p49, %s51, %s35
      %p53 = scmp.ge.s32.totalorder %s52, 2
      %s54 = scalar_select %p53, 0, %s52
      %s55 = ssub.s32 %s35, %s54
      %s56 = ssub.s32 %s36, %s50
      %s57 = sor.u32 %s55, %s56
      %p58 = scmp.eq.s32.totalorder %s57, 0
      %s60 = sadd.s32 %s59, 1
      %s61 = scalar_select %p58, %s59, %s60
      %p64 = pneg %p58
      %p65 = scmp.eq.s32.totalorder %s28, 1
      %p66 = por %p64, %p65
      %p67 = scmp.ne.s32.totalorder %s59, %s62
      %p68 = scmp.eq.s32.totalorder %s28, 0
      %p69 = por %p67, %p68
      %p70 = scmp.ne.s32.totalorder %s59, %s62
      %p71 = scmp.eq.s32.totalorder %s33, 1
      %p72 = por %p70, %p71
      %p73 = scmp.ne.s32.totalorder %s62, %s63
      %p74 = scmp.eq.s32.totalorder %s33, 0
      %p75 = por %p73, %p74
      %p76 = scmp.ne.s32.totalorder %s62, %s63
      %p77 = scmp.eq.s32.totalorder %s34, 1
      %p78 = por %p76, %p77
      %p80 = scmp.ne.s32.totalorder %s63, %s79
      %p81 = scmp.eq.s32.totalorder %s34, 0
      %p82 = por %p80, %p81
      %s83 = ssub.s32 %s35, %s54
      %s84 = ssub.s32 %s37, %s46
      %s85 = sor.u32 %s83, %s84
      %p86 = scmp.eq.s32.totalorder %s85, 0
      %s88 = sadd.s32 %s87, 1
      %s89 = scalar_select %p86, %s87, %s88
      %p92 = pneg %p86
      %p93 = scmp.eq.s32.totalorder %s28, 1
      %p94 = por %p92, %p93
      %p95 = scmp.ne.s32.totalorder %s87, %s90
      %p96 = scmp.eq.s32.totalorder %s28, 0
      %p97 = por %p95, %p96
      %p98 = scmp.ne.s32.totalorder %s87, %s90
      %p99 = scmp.eq.s32.totalorder %s33, 1
      %p100 = por %p98, %p99
      %p101 = scmp.ne.s32.totalorder %s90, %s91
      %p102 = scmp.eq.s32.totalorder %s33, 0
      %p103 = por %p101, %p102
      %p104 = scmp.ne.s32.totalorder %s90, %s91
      %p105 = scmp.eq.s32.totalorder %s34, 1
      %p106 = por %p104, %p105
      %p108 = scmp.ne.s32.totalorder %s91, %s107
      %p109 = scmp.eq.s32.totalorder %s34, 0
      %p110 = por %p108, %p109
      %s111 = ssub.s32 %s35, %s54
      %s112 = ssub.s32 %s37, %s46
      %s113 = sor.u32 %s111, %s112
      %p114 = scmp.eq.s32.totalorder %s113, 0
      %s116 = sadd.s32 %s115, 1
      %s117 = scalar_select %p114, %s115, %s116
      %p120 = pneg %p114
      %p121 = scmp.eq.s32.totalorder %s28, 1
      %p122 = por %p120, %p121
      %p123 = scmp.ne.s32.totalorder %s115, %s118
      %p124 = scmp.eq.s32.totalorder %s28, 0
      %p125 = por %p123, %p124
      %p126 = scmp.ne.s32.totalorder %s115, %s118
      %p127 = scmp.eq.s32.totalorder %s33, 1
      %p128 = por %p126, %p127
      %p129 = scmp.ne.s32.totalorder %s118, %s119
      %p130 = scmp.eq.s32.totalorder %s33, 0
      %p131 = por %p129, %p130
      %p132 = scmp.ne.s32.totalorder %s118, %s119
      %p133 = scmp.eq.s32.totalorder %s34, 1
      %p134 = por %p132, %p133
      %p136 = scmp.ne.s32.totalorder %s119, %s135
      %p137 = scmp.eq.s32.totalorder %s34, 0
      %p138 = por %p136, %p137
      %s140 = sadd.s32 %s139, 1
      %p143 = scmp.eq.s32.totalorder %s28, 1
      %p144 = scmp.ne.s32.totalorder %s139, %s141
      %p145 = scmp.eq.s32.totalorder %s28, 0
      %p146 = por %p144, %p145
      %p147 = scmp.ne.s32.totalorder %s139, %s141
      %p148 = scmp.eq.s32.totalorder %s33, 1
      %p149 = por %p147, %p148
      %p150 = scmp.ne.s32.totalorder %s141, %s142
      %p151 = scmp.eq.s32.totalorder %s33, 0
      %p152 = por %p150, %p151
      %p153 = scmp.ne.s32.totalorder %s141, %s142
      %p154 = scmp.eq.s32.totalorder %s34, 1
      %p155 = por %p153, %p154
      %p157 = scmp.ne.s32.totalorder %s142, %s156
      %p158 = scmp.eq.s32.totalorder %s34, 0
      %p159 = por %p157, %p158
      %s161 = sadd.s32 %s160, 1
      %p164 = scmp.eq.s32.totalorder %s28, 1
      %p165 = scmp.ne.s32.totalorder %s160, %s162
      %p166 = scmp.eq.s32.totalorder %s28, 0
      %p167 = por %p165, %p166
      %p168 = scmp.ne.s32.totalorder %s160, %s162
      %p169 = scmp.eq.s32.totalorder %s33, 1
      %p170 = por %p168, %p169
      %p171 = scmp.ne.s32.totalorder %s162, %s163
      %p172 = scmp.eq.s32.totalorder %s33, 0
      %p173 = por %p171, %p172
      %p174 = scmp.ne.s32.totalorder %s162, %s163
      %p175 = scmp.eq.s32.totalorder %s34, 1
      %p176 = por %p174, %p175
      %p178 = scmp.ne.s32.totalorder %s163, %s177
      %p179 = scmp.eq.s32.totalorder %s34, 0
      %p180 = por %p178, %p179
      %s182 = sadd.s32 %s181, 1
      %p185 = scmp.eq.s32.totalorder %s28, 1
      %p186 = scmp.ne.s32.totalorder %s181, %s183
      %p187 = scmp.eq.s32.totalorder %s28, 0
      %p188 = por %p186, %p187
      %p189 = scmp.ne.s32.totalorder %s181, %s183
      %p190 = scmp.eq.s32.totalorder %s33, 1
      %p191 = por %p189, %p190
      %p192 = scmp.ne.s32.totalorder %s183, %s184
      %p193 = scmp.eq.s32.totalorder %s33, 0
      %p194 = por %p192, %p193
      %p195 = scmp.ne.s32.totalorder %s183, %s184
      %p196 = scmp.eq.s32.totalorder %s34, 1
      %p197 = por %p195, %p196
      %p199 = scmp.ne.s32.totalorder %s184, %s198
      %p200 = scmp.eq.s32.totalorder %s34, 0
      %p201 = por %p199, %p200
      %s203 = sadd.s32 %s202, 1
      %p206 = scmp.eq.s32.totalorder %s28, 1
      %p207 = scmp.ne.s32.totalorder %s202, %s204
      %p208 = scmp.eq.s32.totalorder %s28, 0
      %p209 = por %p207, %p208
      %p210 = scmp.ne.s32.totalorder %s202, %s204
      %p211 = scmp.eq.s32.totalorder %s33, 1
      %p212 = por %p210, %p211
      %p213 = scmp.ne.s32.totalorder %s204, %s205
      %p214 = scmp.eq.s32.totalorder %s33, 0
      %p215 = por %p213, %p214
      %p216 = scmp.ne.s32.totalorder %s204, %s205
      %p217 = scmp.eq.s32.totalorder %s34, 1
      %p218 = por %p216, %p217
      %p220 = scmp.ne.s32.totalorder %s205, %s219
      %p221 = scmp.eq.s32.totalorder %s34, 0
      %p222 = por %p220, %p221
      %s224 = sadd.s32 %s223, 1
      %p227 = scmp.eq.s32.totalorder %s28, 1
      %p228 = scmp.ne.s32.totalorder %s223, %s225
      %p229 = scmp.eq.s32.totalorder %s28, 0
      %p230 = por %p228, %p229
      %p231 = scmp.ne.s32.totalorder %s223, %s225
      %p232 = scmp.eq.s32.totalorder %s33, 1
      %p233 = por %p231, %p232
      %p234 = scmp.ne.s32.totalorder %s225, %s226
      %p235 = scmp.eq.s32.totalorder %s33, 0
      %p236 = por %p234, %p235
      %p237 = scmp.ne.s32.totalorder %s225, %s226
      %p238 = scmp.eq.s32.totalorder %s34, 1
      %p239 = por %p237, %p238
      %p241 = scmp.ne.s32.totalorder %s226, %s240
      %p242 = scmp.eq.s32.totalorder %s34, 0
      %p243 = por %p241, %p242
      %s245 = sadd.s32 %s244, 1
      %p248 = scmp.eq.s32.totalorder %s28, 1
      %p249 = scmp.ne.s32.totalorder %s244, %s246
      %p250 = scmp.eq.s32.totalorder %s28, 0
      %p251 = por %p249, %p250
      %p252 = scmp.ne.s32.totalorder %s244, %s246
      %p253 = scmp.eq.s32.totalorder %s33, 1
      %p254 = por %p252, %p253
      %p255 = scmp.ne.s32.totalorder %s246, %s247
      %p256 = scmp.eq.s32.totalorder %s33, 0
      %p257 = por %p255, %p256
      %p258 = scmp.ne.s32.totalorder %s246, %s247
      %p259 = scmp.eq.s32.totalorder %s34, 1
      %p260 = por %p258, %p259
      %p262 = scmp.ne.s32.totalorder %s247, %s261
      %p263 = scmp.eq.s32.totalorder %s34, 0
      %p264 = por %p262, %p263
      %s266 = sadd.s32 %s265, 1
      %p269 = scmp.eq.s32.totalorder %s28, 1
      %p270 = scmp.ne.s32.totalorder %s265, %s267
      %p271 = scmp.eq.s32.totalorder %s28, 0
      %p272 = por %p270, %p271
      %p273 = scmp.ne.s32.totalorder %s265, %s267
      %p274 = scmp.eq.s32.totalorder %s33, 1
      %p275 = por %p273, %p274
      %p276 = scmp.ne.s32.totalorder %s267, %s268
      %p277 = scmp.eq.s32.totalorder %s33, 0
      %p278 = por %p276, %p277
      %p279 = scmp.ne.s32.totalorder %s267, %s268
      %p280 = scmp.eq.s32.totalorder %s34, 1
      %p281 = por %p279, %p280
      %p283 = scmp.ne.s32.totalorder %s268, %s282
      %p284 = scmp.eq.s32.totalorder %s34, 0
      %p285 = por %p283, %p284
      %s287 = sadd.s32 %s286, 1
      %p290 = scmp.eq.s32.totalorder %s28, 1
      %p291 = scmp.ne.s32.totalorder %s286, %s288
      %p292 = scmp.eq.s32.totalorder %s28, 0
      %p293 = por %p291, %p292
      %p294 = scmp.ne.s32.totalorder %s286, %s288
      %p295 = scmp.eq.s32.totalorder %s33, 1
      %p296 = por %p294, %p295
      %p297 = scmp.ne.s32.totalorder %s288, %s289
      %p298 = scmp.eq.s32.totalorder %s33, 0
      %p299 = por %p297, %p298
      %p300 = scmp.ne.s32.totalorder %s288, %s289
      %p301 = scmp.eq.s32.totalorder %s34, 1
      %p302 = por %p300, %p301
      %p304 = scmp.ne.s32.totalorder %s289, %s303
      %p305 = scmp.eq.s32.totalorder %s34, 0
      %p306 = por %p304, %p305
      %s307 = ssub.s32 %s35, %s54
      %s308 = ssub.s32 %s36, %s50
      %s309 = sor.u32 %s307, %s308
      %p310 = scmp.eq.s32.totalorder %s309, 0
      %s312 = sadd.s32 %s311, 1
      %s313 = scalar_select %p310, %s311, %s312
      %p316 = pneg %p310
      %p317 = scmp.eq.s32.totalorder %s28, 1
      %p318 = por %p316, %p317
      %p319 = scmp.ne.s32.totalorder %s311, %s314
      %p320 = scmp.eq.s32.totalorder %s28, 0
      %p321 = por %p319, %p320
      %p322 = scmp.ne.s32.totalorder %s311, %s314
      %p323 = scmp.eq.s32.totalorder %s33, 1
      %p324 = por %p322, %p323
      %p325 = scmp.ne.s32.totalorder %s314, %s315
      %p326 = scmp.eq.s32.totalorder %s33, 0
      %p327 = por %p325, %p326
      %p328 = scmp.ne.s32.totalorder %s314, %s315
      %p329 = scmp.eq.s32.totalorder %s34, 1
      %p330 = por %p328, %p329
      %p332 = scmp.ne.s32.totalorder %s315, %s331
      %p333 = scmp.eq.s32.totalorder %s34, 0
      %p334 = por %p332, %p333
      %p335 = scmp.le.s32.totalorder 1, %s28
      %p336 = scmp.lt.s32.totalorder %s28, 3
      %p337 = pnand %p335, %p336
      %p338 = pneg %p337
      // Predicated region
      $region9: #{tpu_custom_call.1} parent=5 // pred_check
        _
      $region10: #{tpu_custom_call.1} parent=5 // pred_check_branch
        %340 = sbr.rel (%p337) target = $region12
      $region11: #{tpu_custom_call.1} parent=5 // pred_region
        %s341 = ssub.s32 %s28, 1
        // Predicated region
        $region13: #{tpu_custom_call.1} parent=11 // pred_check
          %p342 = pneg %p152
        $region14: #{tpu_custom_call.1} parent=11 // pred_check_branch
          %344 = sbr.rel (%p342) target = $region16
        $region15: #{tpu_custom_call.1} parent=11 // pred_region
          %s346 = ssub.s32 512, 512
          %347 = vsyncadd [#allocation13], %s346
          %s348 = sshll.u32 [#allocation12], 4
          %s349 = int_to_ptr.vmem [resolvable:$true] %s348
          %354 = dma.hbm_to_vmem [thread:$0]  %s3, 512, %s349, [#allocation13], 128, 128, 8
        $region16: #{tpu_custom_call.1} parent=11 // pred_fallthru
          _
        // Predicated region
        $region17: #{tpu_custom_call.1} parent=11 // pred_check
          %p355 = pneg %p173
        $region18: #{tpu_custom_call.1} parent=11 // pred_check_branch
          %357 = sbr.rel (%p355) target = $region20
        $region19: #{tpu_custom_call.1} parent=11 // pred_region
          %s359 = ssub.s32 512, 512
          %360 = vsyncadd [#allocation13], %s359
          %s361 = sshll.u32 [#allocation14], 4
          %s362 = int_to_ptr.vmem [resolvable:$true] %s361
          %367 = dma.hbm_to_vmem [thread:$0]  %s4, 512, %s362, [#allocation13], 128, 128, 8
        $region20: #{tpu_custom_call.1} parent=11 // pred_fallthru
          _
        // Predicated region
        $region21: #{tpu_custom_call.1} parent=11 // pred_check
          %p368 = pneg %p194
        $region22: #{tpu_custom_call.1} parent=11 // pred_check_branch
          %370 = sbr.rel (%p368) target = $region24
        $region23: #{tpu_custom_call.1} parent=11 // pred_region
          %s372 = ssub.s32 512, 512
          %373 = vsyncadd [#allocation16], %s372
          %s374 = sshll.u32 [#allocation15], 4
          %s375 = int_to_ptr.vmem [resolvable:$true] %s374
          %380 = dma.hbm_to_vmem [thread:$0]  %s5, 512, %s375, [#allocation16], 128, 128, 8
        $region24: #{tpu_custom_call.1} parent=11 // pred_fallthru
          _
        // Predicated region
        $region25: #{tpu_custom_call.1} parent=11 // pred_check
          %p381 = pneg %p215
        $region26: #{tpu_custom_call.1} parent=11 // pred_check_branch
          %383 = sbr.rel (%p381) target = $region28
        $region27: #{tpu_custom_call.1} parent=11 // pred_region
          %s385 = ssub.s32 512, 512
          %386 = vsyncadd [#allocation16], %s385
          %s387 = sshll.u32 [#allocation17], 4
          %s388 = int_to_ptr.vmem [resolvable:$true] %s387
          %393 = dma.hbm_to_vmem [thread:$0]  %s6, 512, %s388, [#allocation16], 128, 128, 8
        $region28: #{tpu_custom_call.1} parent=11 // pred_fallthru
          _
        // Predicated region
        $region29: #{tpu_custom_call.1} parent=11 // pred_check
          %p394 = pneg %p236
        $region30: #{tpu_custom_call.1} parent=11 // pred_check_branch
          %396 = sbr.rel (%p394) target = $region32
        $region31: #{tpu_custom_call.1} parent=11 // pred_region
          _
        $region32: #{tpu_custom_call.1} parent=11 // pred_fallthru
          _
        // Predicated region
        $region33: #{tpu_custom_call.1} parent=11 // pred_check
          %p397 = pneg %p257
        $region34: #{tpu_custom_call.1} parent=11 // pred_check_branch
          %399 = sbr.rel (%p397) target = $region36
        $region35: #{tpu_custom_call.1} parent=11 // pred_region
          _
        $region36: #{tpu_custom_call.1} parent=11 // pred_fallthru
          _
        // Predicated region
        $region37: #{tpu_custom_call.1} parent=11 // pred_check
          %p400 = pneg %p278
        $region38: #{tpu_custom_call.1} parent=11 // pred_check_branch
          %402 = sbr.rel (%p400) target = $region40
        $region39: #{tpu_custom_call.1} parent=11 // pred_region
          _
        $region40: #{tpu_custom_call.1} parent=11 // pred_fallthru
          _
        // Predicated region
        $region41: #{tpu_custom_call.1} parent=11 // pred_check
          %p403 = pneg %p299
        $region42: #{tpu_custom_call.1} parent=11 // pred_check_branch
          %405 = sbr.rel (%p403) target = $region44
        $region43: #{tpu_custom_call.1} parent=11 // pred_region
          _
        $region44: #{tpu_custom_call.1} parent=11 // pred_fallthru
          _
      $region12: #{tpu_custom_call.1} parent=5 // pred_fallthru
        _
      %p406 = scmp.lt.s32.totalorder %s28, 2
      // Predicated region
      $region45: #{tpu_custom_call.1} parent=5 // pred_check
        %p407 = pneg %p406
      $region46: #{tpu_custom_call.1} parent=5 // pred_check_branch
        %409 = sbr.rel (%p407) target = $region48
      $region47: #{tpu_custom_call.1} parent=5 // pred_region
        // Predicated region
        $region49: #{tpu_custom_call.1} parent=47 // pred_check
          %p410 = pneg %p69
        $region50: #{tpu_custom_call.1} parent=47 // pred_check_branch
          %412 = sbr.rel (%p410) target = $region52
        $region51: #{tpu_custom_call.1} parent=47 // pred_region
          %s413 = sand.u32 %s59, 1
          %s414 = scalar_lea.sflag [#allocation7], %s413
          %s415 = sand.u32 %s59, 1
          %s416 = smul.addr %s415, 8
          %s417 = scalar_lea.vmem [#allocation6], %s416
          %s419 = ssub.s32 128, 128
          %420 = vsyncadd %s414, %s419
          %s421 = sadd.s32 %s36, %s35
          %s422 = smul.addr %s421, 128
          %s423 = scalar_lea.hbm %s0, %s422
          %s425 = sshll.u32 %s417, 4
          %s426 = int_to_ptr.vmem [resolvable:$true] %s425
          %428 = dma.hbm_to_vmem [thread:$0]  %s423, 128, %s426, %s414
        $region52: #{tpu_custom_call.1} parent=47 // pred_fallthru
          _
        // Predicated region
        $region53: #{tpu_custom_call.1} parent=47 // pred_check
          %p429 = pneg %p97
        $region54: #{tpu_custom_call.1} parent=47 // pred_check_branch
          %431 = sbr.rel (%p429) target = $region56
        $region55: #{tpu_custom_call.1} parent=47 // pred_region
          %s432 = sand.u32 %s28, 1
          %s433 = scalar_lea.sflag [#allocation10], %s432
          %s434 = sand.u32 %s87, 1
          %s435 = smul.addr %s434, 8
          %s436 = scalar_lea.vmem [#allocation9], %s435
          %s438 = ssub.s32 128, 128
          %439 = vsyncadd %s433, %s438
          %s440 = sadd.s32 %s37, %s35
          %s441 = smul.addr %s440, 128
          %s442 = scalar_lea.hbm %s1, %s441
          %s444 = sshll.u32 %s436, 4
          %s445 = int_to_ptr.vmem [resolvable:$true] %s444
          %447 = dma.hbm_to_vmem [thread:$0]  %s442, 128, %s445, %s433
        $region56: #{tpu_custom_call.1} parent=47 // pred_fallthru
          _
        // Predicated region
        $region57: #{tpu_custom_call.1} parent=47 // pred_check
          %p448 = pneg %p125
        $region58: #{tpu_custom_call.1} parent=47 // pred_check_branch
          %450 = sbr.rel (%p448) target = $region60
        $region59: #{tpu_custom_call.1} parent=47 // pred_region
          %s451 = sand.u32 %s28, 1
          %s452 = scalar_lea.sflag [#allocation10], %s451
          %s453 = sand.u32 %s115, 1
          %s454 = smul.addr %s453, 8
          %s455 = scalar_lea.vmem [#allocation11], %s454
          %s457 = ssub.s32 128, 128
          %458 = vsyncadd %s452, %s457
          %s459 = sadd.s32 %s37, %s35
          %s460 = smul.addr %s459, 128
          %s461 = scalar_lea.hbm %s2, %s460
          %s463 = sshll.u32 %s455, 4
          %s464 = int_to_ptr.vmem [resolvable:$true] %s463
          %466 = dma.hbm_to_vmem [thread:$0]  %s461, 128, %s464, %s452
        $region60: #{tpu_custom_call.1} parent=47 // pred_fallthru
          _
      $region48: #{tpu_custom_call.1} parent=5 // pred_fallthru
        _
      %p467 = scmp.le.s32.totalorder 1, %s28
      %p468 = scmp.lt.s32.totalorder %s28, 3
      %p469 = pnand %p467, %p468
      %p470 = pneg %p469
      // Predicated region
      $region61: #{tpu_custom_call.1} parent=5 // pred_check
        _
      $region62: #{tpu_custom_call.1} parent=5 // pred_check_branch
        %472 = sbr.rel (%p469) target = $region64
      $region63: #{tpu_custom_call.1} parent=5 // pred_region
        %s473 = ssub.s32 %s28, 1
        %s474 = sand.u32 %s62, 1
        %s475 = scalar_lea.sflag [#allocation7], %s474
        %s476 = sand.u32 %s62, 1
        %s477 = smul.addr %s476, 8
        %s478 = scalar_lea.vmem [#allocation6], %s477
        // Predicated region
        $region65: #{tpu_custom_call.1} parent=63 // pred_check
          %p479 = pneg %p75
        $region66: #{tpu_custom_call.1} parent=63 // pred_check_branch
          %481 = sbr.rel (%p479) target = $region68
        $region67: #{tpu_custom_call.1} parent=63 // pred_region
          %482 = dma.done %s475, 128
        $region68: #{tpu_custom_call.1} parent=63 // pred_fallthru
          _
        %s483 = sand.u32 %s33, 1
        %s484 = scalar_lea.sflag [#allocation10], %s483
        %s485 = sand.u32 %s90, 1
        %s486 = smul.addr %s485, 8
        %s487 = scalar_lea.vmem [#allocation9], %s486
        // Predicated region
        $region69: #{tpu_custom_call.1} parent=63 // pred_check
          %p488 = pneg %p103
        $region70: #{tpu_custom_call.1} parent=63 // pred_check_branch
          %490 = sbr.rel (%p488) target = $region72
        $region71: #{tpu_custom_call.1} parent=63 // pred_region
          %491 = dma.done %s484, 128
        $region72: #{tpu_custom_call.1} parent=63 // pred_fallthru
          _
        %s492 = sand.u32 %s33, 1
        %s493 = scalar_lea.sflag [#allocation10], %s492
        %s494 = sand.u32 %s118, 1
        %s495 = smul.addr %s494, 8
        %s496 = scalar_lea.vmem [#allocation11], %s495
        // Predicated region
        $region73: #{tpu_custom_call.1} parent=63 // pred_check
          %p497 = pneg %p131
        $region74: #{tpu_custom_call.1} parent=63 // pred_check_branch
          %499 = sbr.rel (%p497) target = $region76
        $region75: #{tpu_custom_call.1} parent=63 // pred_region
          %500 = dma.done %s493, 128
        $region76: #{tpu_custom_call.1} parent=63 // pred_fallthru
          _
        // Predicated region
        $region77: #{tpu_custom_call.1} parent=63 // pred_check
          %p501 = pneg %p152
        $region78: #{tpu_custom_call.1} parent=63 // pred_check_branch
          %503 = sbr.rel (%p501) target = $region80
        $region79: #{tpu_custom_call.1} parent=63 // pred_region
          %504 = dma.done [#allocation13], 512
        $region80: #{tpu_custom_call.1} parent=63 // pred_fallthru
          _
        // Predicated region
        $region81: #{tpu_custom_call.1} parent=63 // pred_check
          %p505 = pneg %p173
        $region82: #{tpu_custom_call.1} parent=63 // pred_check_branch
          %507 = sbr.rel (%p505) target = $region84
        $region83: #{tpu_custom_call.1} parent=63 // pred_region
          %508 = dma.done [#allocation13], 512
        $region84: #{tpu_custom_call.1} parent=63 // pred_fallthru
          _
        // Predicated region
        $region85: #{tpu_custom_call.1} parent=63 // pred_check
          %p509 = pneg %p194
        $region86: #{tpu_custom_call.1} parent=63 // pred_check_branch
          %511 = sbr.rel (%p509) target = $region88
        $region87: #{tpu_custom_call.1} parent=63 // pred_region
          %512 = dma.done [#allocation16], 512
        $region88: #{tpu_custom_call.1} parent=63 // pred_fallthru
          _
        // Predicated region
        $region89: #{tpu_custom_call.1} parent=63 // pred_check
          %p513 = pneg %p215
        $region90: #{tpu_custom_call.1} parent=63 // pred_check_branch
          %515 = sbr.rel (%p513) target = $region92
        $region91: #{tpu_custom_call.1} parent=63 // pred_region
          %516 = dma.done [#allocation16], 512
        $region92: #{tpu_custom_call.1} parent=63 // pred_fallthru
          _
        %s517 = sand.u32 %s62, 1
        %s518 = scalar_lea.sflag [#allocation7], %s517
        %s519 = sand.u32 %s62, 1
        %s520 = smul.addr %s519, 8
        %s521 = scalar_lea.vmem [#allocation6], %s520
        %p522 = pneg %p75
        %p523 = pneg %p72
        %s524 = sand.u32 %s33, 1
        %s525 = scalar_lea.sflag [#allocation10], %s524
        %s526 = sand.u32 %s90, 1
        %s527 = smul.addr %s526, 8
        %s528 = scalar_lea.vmem [#allocation9], %s527
        %p529 = pneg %p103
        %p530 = pneg %p100
        %s531 = sand.u32 %s33, 1
        %s532 = scalar_lea.sflag [#allocation10], %s531
        %s533 = sand.u32 %s118, 1
        %s534 = smul.addr %s533, 8
        %s535 = scalar_lea.vmem [#allocation11], %s534
        %p536 = pneg %p131
        %p537 = pneg %p128
        %p538 = pneg %p152
        %p539 = pneg %p149
        %p540 = pneg %p173
        %p541 = pneg %p170
        %p542 = pneg %p194
        %p543 = pneg %p191
        %p544 = pneg %p215
        %p545 = pneg %p212
        %p546 = pneg %p236
        %p547 = pneg %p233
        %p548 = pneg %p257
        %p549 = pneg %p254
        %p550 = pneg %p278
        %p551 = pneg %p275
        %p552 = pneg %p299
        %p553 = pneg %p296
        %p554 = pneg %p327
        %p555 = pneg %p324
        %s556 = sand.u32 %s314, 1
        %s557 = scalar_lea.sflag [#allocation8], %s556
        %s558 = sand.u32 %s314, 1
        %s559 = smul.addr %s558, 8
        %s560 = scalar_lea.vmem [#allocation18], %s559
        %p561 = scmp.eq.s32.totalorder %s40, 0
        // Predicated region
        $region93: #{tpu_custom_call.1} parent=63 // pred_check
          %p562 = pneg %p561
        $region94: #{tpu_custom_call.1} parent=63 // pred_check_branch
          %564 = sbr.rel (%p562) target = $region96
        $region95: #{tpu_custom_call.1} parent=63 // pred_region
          %v565 = vld [vmem:[%s478] sm:$0xff]
          %v566 = vld [vmem:[#allocation12] sm:$0xff]
          %v567 = vld [vmem:[#allocation12 + $0x8] sm:$0xff]
          %v568 = vld [vmem:[#allocation12 + $0x10] sm:$0xff]
          %v569 = vld [vmem:[#allocation12 + $0x18] sm:$0xff]
          %v570 = vld [vmem:[%s7] sm:$0x1]
          %v572 = vlaneseq
          %v573 = vshrl.u32 %v572, 7
          %v574 = vsub.s32 0, %v573
          %v575 = vrot.slane %v570, %v574
          %vm577 = vcmask 261120
          %v579 = vsel %vm577, %v565, 0
          %581 = vmatprep.subr.mxu0 0.0
          %582 = vmatpush1.msra.mxu0 0.0
          %583 = vmatprep.subr.mxu0 0.0
          %584 = vmatpush1.msra.mxu0 0.0
          %585 = vmatprep.subr.mxu0 0.0
          %586 = vmatpush1.msra.mxu0 0.0
          %587 = vmatprep.subr.mxu0 0.0
          %588 = vmatpush1.msra.mxu0 0.0
          %589 = vmatprep.subr.mxu0 0.0
          %590 = vmatpush1.msra.mxu0 0.0
          %591 = vmatprep.subr.mxu0 0.0
          %592 = vmatpush1.msra.mxu0 0.0
          %593 = vmatprep.subr.mxu0 0.0
          %594 = vmatpush1.msra.mxu0 0.0
          %595 = vmatprep.subr.mxu0 0.0
          %596 = vmatpush1.msra.mxu0 0.0
          %597 = vmatprep.subr.mxu0 0.0
          %598 = vmatpush1.msra.mxu0 0.0
          %599 = vmatprep.subr.mxu0 0.0
          %600 = vmatpush1.msra.mxu0 0.0
          %601 = vmatprep.subr.mxu0 0.0
          %602 = vmatpush1.msra.mxu0 0.0
          %603 = vmatprep.subr.mxu0 0.0
          %604 = vmatpush1.msra.mxu0 0.0
          %605 = vmatprep.subr.mxu0 0.0
          %606 = vmatpush1.msra.mxu0 %v569
          %607 = vmatprep.subr.mxu0 0.0
          %608 = vmatpush1.msra.mxu0 %v568
          %609 = vmatprep.subr.mxu0 0.0
          %610 = vmatpush1.msra.mxu0 %v567
          %611 = vmatprep.subr.mxu0 0.0
          %612 = vmatpush1.msra.mxu0 %v566
          %613 = vmatprep.subr.mxu0 0.0
          %614 = vmatpush2.msra.mxu0 0.0
          %615 = vmatprep.subr.mxu0 0.0
          %616 = vmatpush2.msra.mxu0 0.0
          %617 = vmatprep.subr.mxu0 0.0
          %618 = vmatpush2.msra.mxu0 0.0
          %619 = vmatprep.subr.mxu0 0.0
          %620 = vmatpush2.msra.mxu0 0.0
          %621 = vmatprep.subr.mxu0 0.0
          %622 = vmatpush2.msra.mxu0 0.0
          %623 = vmatprep.subr.mxu0 0.0
          %624 = vmatpush2.msra.mxu0 0.0
          %625 = vmatprep.subr.mxu0 0.0
          %626 = vmatpush2.msra.mxu0 0.0
          %627 = vmatprep.subr.mxu0 0.0
          %628 = vmatpush2.msra.mxu0 0.0
          %629 = vmatprep.subr.mxu0 0.0
          %630 = vmatpush2.msra.mxu0 0.0
          %631 = vmatprep.subr.mxu0 0.0
          %632 = vmatpush2.msra.mxu0 0.0
          %633 = vmatprep.subr.mxu0 0.0
          %634 = vmatpush2.msra.mxu0 0.0
          %635 = vmatprep.subr.mxu0 0.0
          %636 = vmatpush2.msra.mxu0 0.0
          %637 = vmatprep.subr.mxu0 0.0
          %638 = vmatpush2.msra.mxu0 0.0
          %639 = vmatprep.subr.mxu0 0.0
          %640 = vmatpush2.msra.mxu0 0.0
          %641 = vmatprep.subr.mxu0 0.0
          %642 = vmatpush2.msra.mxu0 0.0
          %643 = vmatprep.subr.mxu0 0.0
          %644 = vmatpush2.msra.mxu0 0.0
          %645 = vmatprep.mubr.f32.mxu0 0.0
          %646 = vmatmul.mubr.f32.gmra.mxu0 %v579
          %v647 = vpop.f32.mrf.mxu0
          %v648 = vadd.f32 %v575, %v647
          %v649 = vpop.f32.mrf.mxu0
          %650 = vdwg.mxu0
          %v651 = vmul.f32 %v648, 0.35355338
          %652 = vst.msk [vmem:[#allocation2] sm:$0xff] %vm577, %v651
          %vm653 = vcmask 7168
          %654 = vst.msk [vmem:[#allocation3] sm:$0xff] %vm653, -inf
          %655 = vst.msk [vmem:[#allocation3 + $0x8] sm:$0xff] %vm653, -inf
          %656 = vst.msk [vmem:[#allocation3 + $0x10] sm:$0xff] %vm653, -inf
          %657 = vst.msk [vmem:[#allocation3 + $0x18] sm:$0xff] %vm653, -inf
          %658 = vst.msk [vmem:[#allocation4] sm:$0xff] %vm653, 0.0
          %659 = vst.msk [vmem:[#allocation4 + $0x8] sm:$0xff] %vm653, 0.0
          %660 = vst.msk [vmem:[#allocation4 + $0x10] sm:$0xff] %vm653, 0.0
          %661 = vst.msk [vmem:[#allocation4 + $0x18] sm:$0xff] %vm653, 0.0
          %662 = vst.msk [vmem:[#allocation5] sm:$0xff] %vm577, 0.0
        $region96: #{tpu_custom_call.1} parent=63 // pred_fallthru
          _
        %v663 = vld [vmem:[%s487] sm:$0xff]
        %v664 = vld [vmem:[#allocation14] sm:$0xff]
        %v665 = vld [vmem:[#allocation14 + $0x8] sm:$0xff]
        %v666 = vld [vmem:[#allocation14 + $0x10] sm:$0xff]
        %v667 = vld [vmem:[#allocation14 + $0x18] sm:$0xff]
        %v668 = vld [vmem:[%s8] sm:$0x1]
        %v670 = vlaneseq
        %v671 = vshrl.u32 %v670, 7
        %v672 = vsub.s32 0, %v671
        %v673 = vrot.slane %v668, %v672
        %vm675 = vcmask 261120
        %v677 = vsel %vm675, %v663, 0
        %679 = vmatprep.subr.mxu0 0.0
        %680 = vmatpush1.msra.mxu0 0.0
        %681 = vmatprep.subr.mxu0 0.0
        %682 = vmatpush1.msra.mxu0 0.0
        %683 = vmatprep.subr.mxu0 0.0
        %684 = vmatpush1.msra.mxu0 0.0
        %685 = vmatprep.subr.mxu0 0.0
        %686 = vmatpush1.msra.mxu0 0.0
        %687 = vmatprep.subr.mxu0 0.0
        %688 = vmatpush1.msra.mxu0 0.0
        %689 = vmatprep.subr.mxu0 0.0
        %690 = vmatpush1.msra.mxu0 0.0
        %691 = vmatprep.subr.mxu0 0.0
        %692 = vmatpush1.msra.mxu0 0.0
        %693 = vmatprep.subr.mxu0 0.0
        %694 = vmatpush1.msra.mxu0 0.0
        %695 = vmatprep.subr.mxu0 0.0
        %696 = vmatpush1.msra.mxu0 0.0
        %697 = vmatprep.subr.mxu0 0.0
        %698 = vmatpush1.msra.mxu0 0.0
        %699 = vmatprep.subr.mxu0 0.0
        %700 = vmatpush1.msra.mxu0 0.0
        %701 = vmatprep.subr.mxu0 0.0
        %702 = vmatpush1.msra.mxu0 0.0
        %703 = vmatprep.subr.mxu0 0.0
        %704 = vmatpush1.msra.mxu0 %v667
        %705 = vmatprep.subr.mxu0 0.0
        %706 = vmatpush1.msra.mxu0 %v666
        %707 = vmatprep.subr.mxu0 0.0
        %708 = vmatpush1.msra.mxu0 %v665
        %709 = vmatprep.subr.mxu0 0.0
        %710 = vmatpush1.msra.mxu0 %v664
        %711 = vmatprep.subr.mxu0 0.0
        %712 = vmatpush2.msra.mxu0 0.0
        %713 = vmatprep.subr.mxu0 0.0
        %714 = vmatpush2.msra.mxu0 0.0
        %715 = vmatprep.subr.mxu0 0.0
        %716 = vmatpush2.msra.mxu0 0.0
        %717 = vmatprep.subr.mxu0 0.0
        %718 = vmatpush2.msra.mxu0 0.0
        %719 = vmatprep.subr.mxu0 0.0
        %720 = vmatpush2.msra.mxu0 0.0
        %721 = vmatprep.subr.mxu0 0.0
        %722 = vmatpush2.msra.mxu0 0.0
        %723 = vmatprep.subr.mxu0 0.0
        %724 = vmatpush2.msra.mxu0 0.0
        %725 = vmatprep.subr.mxu0 0.0
        %726 = vmatpush2.msra.mxu0 0.0
        %727 = vmatprep.subr.mxu0 0.0
        %728 = vmatpush2.msra.mxu0 0.0
        %729 = vmatprep.subr.mxu0 0.0
        %730 = vmatpush2.msra.mxu0 0.0
        %731 = vmatprep.subr.mxu0 0.0
        %732 = vmatpush2.msra.mxu0 0.0
        %733 = vmatprep.subr.mxu0 0.0
        %734 = vmatpush2.msra.mxu0 0.0
        %735 = vmatprep.subr.mxu0 0.0
        %736 = vmatpush2.msra.mxu0 0.0
        %737 = vmatprep.subr.mxu0 0.0
        %738 = vmatpush2.msra.mxu0 0.0
        %739 = vmatprep.subr.mxu0 0.0
        %740 = vmatpush2.msra.mxu0 0.0
        %741 = vmatprep.subr.mxu0 0.0
        %742 = vmatpush2.msra.mxu0 0.0
        %743 = vmatprep.mubr.f32.mxu0 0.0
        %744 = vmatmul.mubr.f32.gmra.mxu0 %v677
        %v745 = vpop.f32.mrf.mxu0
        %v746 = vadd.f32 %v673, %v745
        %v747 = vpop.f32.mrf.mxu0
        %748 = vdwg.mxu0
        %v749 = vld [vmem:[%s496] sm:$0xff]
        %v750 = vld [vmem:[#allocation15] sm:$0xff]
        %v751 = vld [vmem:[#allocation15 + $0x8] sm:$0xff]
        %v752 = vld [vmem:[#allocation15 + $0x10] sm:$0xff]
        %v753 = vld [vmem:[#allocation15 + $0x18] sm:$0xff]
        %v754 = vld [vmem:[%s9] sm:$0x1]
        %v756 = vlaneseq
        %v757 = vshrl.u32 %v756, 7
        %v758 = vsub.s32 0, %v757
        %v759 = vrot.slane %v754, %v758
        %v762 = vsel %vm675, %v749, 0
        %764 = vmatprep.subr.mxu0 0.0
        %765 = vmatpush1.msra.mxu0 0.0
        %766 = vmatprep.subr.mxu0 0.0
        %767 = vmatpush1.msra.mxu0 0.0
        %768 = vmatprep.subr.mxu0 0.0
        %769 = vmatpush1.msra.mxu0 0.0
        %770 = vmatprep.subr.mxu0 0.0
        %771 = vmatpush1.msra.mxu0 0.0
        %772 = vmatprep.subr.mxu0 0.0
        %773 = vmatpush1.msra.mxu0 0.0
        %774 = vmatprep.subr.mxu0 0.0
        %775 = vmatpush1.msra.mxu0 0.0
        %776 = vmatprep.subr.mxu0 0.0
        %777 = vmatpush1.msra.mxu0 0.0
        %778 = vmatprep.subr.mxu0 0.0
        %779 = vmatpush1.msra.mxu0 0.0
        %780 = vmatprep.subr.mxu0 0.0
        %781 = vmatpush1.msra.mxu0 0.0
        %782 = vmatprep.subr.mxu0 0.0
        %783 = vmatpush1.msra.mxu0 0.0
        %784 = vmatprep.subr.mxu0 0.0
        %785 = vmatpush1.msra.mxu0 0.0
        %786 = vmatprep.subr.mxu0 0.0
        %787 = vmatpush1.msra.mxu0 0.0
        %788 = vmatprep.subr.mxu0 0.0
        %789 = vmatpush1.msra.mxu0 %v753
        %790 = vmatprep.subr.mxu0 0.0
        %791 = vmatpush1.msra.mxu0 %v752
        %792 = vmatprep.subr.mxu0 0.0
        %793 = vmatpush1.msra.mxu0 %v751
        %794 = vmatprep.subr.mxu0 0.0
        %795 = vmatpush1.msra.mxu0 %v750
        %796 = vmatprep.subr.mxu0 0.0
        %797 = vmatpush2.msra.mxu0 0.0
        %798 = vmatprep.subr.mxu0 0.0
        %799 = vmatpush2.msra.mxu0 0.0
        %800 = vmatprep.subr.mxu0 0.0
        %801 = vmatpush2.msra.mxu0 0.0
        %802 = vmatprep.subr.mxu0 0.0
        %803 = vmatpush2.msra.mxu0 0.0
        %804 = vmatprep.subr.mxu0 0.0
        %805 = vmatpush2.msra.mxu0 0.0
        %806 = vmatprep.subr.mxu0 0.0
        %807 = vmatpush2.msra.mxu0 0.0
        %808 = vmatprep.subr.mxu0 0.0
        %809 = vmatpush2.msra.mxu0 0.0
        %810 = vmatprep.subr.mxu0 0.0
        %811 = vmatpush2.msra.mxu0 0.0
        %812 = vmatprep.subr.mxu0 0.0
        %813 = vmatpush2.msra.mxu0 0.0
        %814 = vmatprep.subr.mxu0 0.0
        %815 = vmatpush2.msra.mxu0 0.0
        %816 = vmatprep.subr.mxu0 0.0
        %817 = vmatpush2.msra.mxu0 0.0
        %818 = vmatprep.subr.mxu0 0.0
        %819 = vmatpush2.msra.mxu0 0.0
        %820 = vmatprep.subr.mxu0 0.0
        %821 = vmatpush2.msra.mxu0 0.0
        %822 = vmatprep.subr.mxu0 0.0
        %823 = vmatpush2.msra.mxu0 0.0
        %824 = vmatprep.subr.mxu0 0.0
        %825 = vmatpush2.msra.mxu0 0.0
        %826 = vmatprep.subr.mxu0 0.0
        %827 = vmatpush2.msra.mxu0 0.0
        %828 = vmatprep.mubr.f32.mxu0 0.0
        %829 = vmatmul.mubr.f32.gmra.mxu0 %v762
        %v830 = vpop.f32.mrf.mxu0
        %v831 = vadd.f32 %v759, %v830
        %v832 = vpop.f32.mrf.mxu0
        %833 = vdwg.mxu0
        %v834 = vld [vmem:[#allocation2] sm:$0xff]
        %vm835 = vcmask 64512
        %v837 = vsel %vm835, %v834, 0
        %v840 = vsel %vm835, %v746, 0
        %842 = vmatprep.subr.mxu0 0.0
        %843 = vmatpush1.xpose.msra.mxu0 0.0
        %844 = vmatprep.subr.mxu0 0.0
        %845 = vmatpush1.xpose.msra.mxu0 0.0
        %846 = vmatprep.subr.mxu0 0.0
        %847 = vmatpush1.xpose.msra.mxu0 0.0
        %848 = vmatprep.subr.mxu0 0.0
        %849 = vmatpush1.xpose.msra.mxu0 0.0
        %850 = vmatprep.subr.mxu0 0.0
        %851 = vmatpush1.xpose.msra.mxu0 0.0
        %852 = vmatprep.subr.mxu0 0.0
        %853 = vmatpush1.xpose.msra.mxu0 0.0
        %854 = vmatprep.subr.mxu0 0.0
        %855 = vmatpush1.xpose.msra.mxu0 0.0
        %856 = vmatprep.subr.mxu0 0.0
        %857 = vmatpush1.xpose.msra.mxu0 0.0
        %858 = vmatprep.subr.mxu0 0.0
        %859 = vmatpush1.xpose.msra.mxu0 0.0
        %860 = vmatprep.subr.mxu0 0.0
        %861 = vmatpush1.xpose.msra.mxu0 0.0
        %862 = vmatprep.subr.mxu0 0.0
        %863 = vmatpush1.xpose.msra.mxu0 0.0
        %864 = vmatprep.subr.mxu0 0.0
        %865 = vmatpush1.xpose.msra.mxu0 0.0
        %866 = vmatprep.subr.mxu0 0.0
        %867 = vmatpush1.xpose.msra.mxu0 0.0
        %868 = vmatprep.subr.mxu0 0.0
        %869 = vmatpush1.xpose.msra.mxu0 0.0
        %870 = vmatprep.subr.mxu0 0.0
        %871 = vmatpush1.xpose.msra.mxu0 0.0
        %872 = vmatprep.subr.mxu0 0.0
        %873 = vmatpush1.xpose.msra.mxu0 %v840
        %874 = vmatprep.subr.mxu0 0.0
        %875 = vmatpush2.xpose.msra.mxu0 0.0
        %876 = vmatprep.subr.mxu0 0.0
        %877 = vmatpush2.xpose.msra.mxu0 0.0
        %878 = vmatprep.subr.mxu0 0.0
        %879 = vmatpush2.xpose.msra.mxu0 0.0
        %880 = vmatprep.subr.mxu0 0.0
        %881 = vmatpush2.xpose.msra.mxu0 0.0
        %882 = vmatprep.subr.mxu0 0.0
        %883 = vmatpush2.xpose.msra.mxu0 0.0
        %884 = vmatprep.subr.mxu0 0.0
        %885 = vmatpush2.xpose.msra.mxu0 0.0
        %886 = vmatprep.subr.mxu0 0.0
        %887 = vmatpush2.xpose.msra.mxu0 0.0
        %888 = vmatprep.subr.mxu0 0.0
        %889 = vmatpush2.xpose.msra.mxu0 0.0
        %890 = vmatprep.subr.mxu0 0.0
        %891 = vmatpush2.xpose.msra.mxu0 0.0
        %892 = vmatprep.subr.mxu0 0.0
        %893 = vmatpush2.xpose.msra.mxu0 0.0
        %894 = vmatprep.subr.mxu0 0.0
        %895 = vmatpush2.xpose.msra.mxu0 0.0
        %896 = vmatprep.subr.mxu0 0.0
        %897 = vmatpush2.xpose.msra.mxu0 0.0
        %898 = vmatprep.subr.mxu0 0.0
        %899 = vmatpush2.xpose.msra.mxu0 0.0
        %900 = vmatprep.subr.mxu0 0.0
        %901 = vmatpush2.xpose.msra.mxu0 0.0
        %902 = vmatprep.subr.mxu0 0.0
        %903 = vmatpush2.xpose.msra.mxu0 0.0
        %904 = vmatprep.subr.mxu0 0.0
        %905 = vmatpush2.xpose.msra.mxu0 0.0
        %906 = vmatprep.mubr.f32.mxu0 0.0
        %907 = vmatmul.mubr.f32.gmra.mxu0 %v837
        %v908 = vpop.f32.mrf.mxu0
        %v909 = vadd.f32 0.0, %v908
        %v910 = vpop.f32.mrf.mxu0
        %911 = vdwg.mxu0
        %v912 = vld [vmem:[#allocation3] sm:$0xff]
        %v913 = vsel %vm835, %v909, -inf
        %914 = vmax.xlane.f32.xlu0 %v913
        %v915 = vpop.xlane.xlu0 %914
        %v916 = vmax.f32 %v912, %v915
        %v917 = vsub.f32 %v912, %v916
        %v918 = vmul.f32 %v917, 1.442695
        %v919 = vpow.pop %v918
        %921 = vset.pattern.permute.xlu0 0
        %922 = vperm.xlu0 %921, %v916
        %v923 = vpop.permute.xlu0 %922
        %v925 = vsub.f32 %v909, %v923
        %v926 = vmul.f32 %v925, 1.442695
        %v927 = vpow.pop %v926
        %v928 = vld [vmem:[#allocation4] sm:$0xff]
        %v929 = vmul.f32 %v919, %v928
        %v930 = vsel %vm835, %v927, 0.0
        %931 = vadd.xlane.f32.xlu0 %v930
        %v932 = vpop.xlane.xlu0 %931
        %v933 = vadd.f32 %v929, %v932
        %vm934 = vcmask 7168
        %935 = vst.msk [vmem:[#allocation4] sm:$0xff] %vm934, %v933
        %v937 = vsel %vm835, %v927, 0
        %939 = vmatprep.subr.mxu0 0.0
        %940 = vmatpush1.msra.mxu0 0.0
        %941 = vmatprep.subr.mxu0 0.0
        %942 = vmatpush1.msra.mxu0 0.0
        %943 = vmatprep.subr.mxu0 0.0
        %944 = vmatpush1.msra.mxu0 0.0
        %945 = vmatprep.subr.mxu0 0.0
        %946 = vmatpush1.msra.mxu0 0.0
        %947 = vmatprep.subr.mxu0 0.0
        %948 = vmatpush1.msra.mxu0 0.0
        %949 = vmatprep.subr.mxu0 0.0
        %950 = vmatpush1.msra.mxu0 0.0
        %951 = vmatprep.subr.mxu0 0.0
        %952 = vmatpush1.msra.mxu0 0.0
        %953 = vmatprep.subr.mxu0 0.0
        %954 = vmatpush1.msra.mxu0 0.0
        %955 = vmatprep.subr.mxu0 0.0
        %956 = vmatpush1.msra.mxu0 0.0
        %957 = vmatprep.subr.mxu0 0.0
        %958 = vmatpush1.msra.mxu0 0.0
        %959 = vmatprep.subr.mxu0 0.0
        %960 = vmatpush1.msra.mxu0 0.0
        %961 = vmatprep.subr.mxu0 0.0
        %962 = vmatpush1.msra.mxu0 0.0
        %963 = vmatprep.subr.mxu0 0.0
        %964 = vmatpush1.msra.mxu0 0.0
        %965 = vmatprep.subr.mxu0 0.0
        %966 = vmatpush1.msra.mxu0 0.0
        %967 = vmatprep.subr.mxu0 0.0
        %968 = vmatpush1.msra.mxu0 0.0
        %969 = vmatprep.subr.mxu0 0.0
        %970 = vmatpush1.msra.mxu0 %v831
        %971 = vmatprep.subr.mxu0 0.0
        %972 = vmatpush2.msra.mxu0 0.0
        %973 = vmatprep.subr.mxu0 0.0
        %974 = vmatpush2.msra.mxu0 0.0
        %975 = vmatprep.subr.mxu0 0.0
        %976 = vmatpush2.msra.mxu0 0.0
        %977 = vmatprep.subr.mxu0 0.0
        %978 = vmatpush2.msra.mxu0 0.0
        %979 = vmatprep.subr.mxu0 0.0
        %980 = vmatpush2.msra.mxu0 0.0
        %981 = vmatprep.subr.mxu0 0.0
        %982 = vmatpush2.msra.mxu0 0.0
        %983 = vmatprep.subr.mxu0 0.0
        %984 = vmatpush2.msra.mxu0 0.0
        %985 = vmatprep.subr.mxu0 0.0
        %986 = vmatpush2.msra.mxu0 0.0
        %987 = vmatprep.subr.mxu0 0.0
        %988 = vmatpush2.msra.mxu0 0.0
        %989 = vmatprep.subr.mxu0 0.0
        %990 = vmatpush2.msra.mxu0 0.0
        %991 = vmatprep.subr.mxu0 0.0
        %992 = vmatpush2.msra.mxu0 0.0
        %993 = vmatprep.subr.mxu0 0.0
        %994 = vmatpush2.msra.mxu0 0.0
        %995 = vmatprep.subr.mxu0 0.0
        %996 = vmatpush2.msra.mxu0 0.0
        %997 = vmatprep.subr.mxu0 0.0
        %998 = vmatpush2.msra.mxu0 0.0
        %999 = vmatprep.subr.mxu0 0.0
        %1000 = vmatpush2.msra.mxu0 0.0
        %1001 = vmatprep.subr.mxu0 0.0
        %1002 = vmatpush2.msra.mxu0 0.0
        %1003 = vmatprep.mubr.f32.mxu0 0.0
        %1004 = vmatmul.mubr.f32.gmra.mxu0 %v937
        %v1005 = vpop.f32.mrf.mxu0
        %v1006 = vadd.f32 0.0, %v1005
        %v1007 = vpop.f32.mrf.mxu0
        %1008 = vdwg.mxu0
        %v1009 = vld [vmem:[#allocation5] sm:$0xff]
        %1011 = vset.pattern.permute.xlu0 0
        %1012 = vperm.xlu0 %1011, %v919
        %v1013 = vpop.permute.xlu0 %1012
        %v1015 = vmul.f32 %v1013, %v1009
        %v1016 = vadd.f32 %v1015, %v1006
        %1017 = vst.msk [vmem:[#allocation5] sm:$0xff] %vm835, %v1016
        %1018 = vst.msk [vmem:[#allocation3] sm:$0xff] %vm934, %v916
        %v1019 = vld [vmem:[#allocation2] sm:$0xff]
        %1021 = vrot.lane.b32.xlu0 %v1019, 120
        %v1022 = vpop.permute.xlu0 %1021
        %1023 = vrot.lane.b32.xlu0 %v746, 120
        %v1024 = vpop.permute.xlu0 %1023
        %v1025 = vsel %vm835, %v1022, 0
        %v1027 = vsel %vm835, %v1024, 0
        %1029 = vmatprep.subr.mxu0 0.0
        %1030 = vmatpush1.xpose.msra.mxu0 0.0
        %1031 = vmatprep.subr.mxu0 0.0
        %1032 = vmatpush1.xpose.msra.mxu0 0.0
        %1033 = vmatprep.subr.mxu0 0.0
        %1034 = vmatpush1.xpose.msra.mxu0 0.0
        %1035 = vmatprep.subr.mxu0 0.0
        %1036 = vmatpush1.xpose.msra.mxu0 0.0
        %1037 = vmatprep.subr.mxu0 0.0
        %1038 = vmatpush1.xpose.msra.mxu0 0.0
        %1039 = vmatprep.subr.mxu0 0.0
        %1040 = vmatpush1.xpose.msra.mxu0 0.0
        %1041 = vmatprep.subr.mxu0 0.0
        %1042 = vmatpush1.xpose.msra.mxu0 0.0
        %1043 = vmatprep.subr.mxu0 0.0
        %1044 = vmatpush1.xpose.msra.mxu0 0.0
        %1045 = vmatprep.subr.mxu0 0.0
        %1046 = vmatpush1.xpose.msra.mxu0 0.0
        %1047 = vmatprep.subr.mxu0 0.0
        %1048 = vmatpush1.xpose.msra.mxu0 0.0
        %1049 = vmatprep.subr.mxu0 0.0
        %1050 = vmatpush1.xpose.msra.mxu0 0.0
        %1051 = vmatprep.subr.mxu0 0.0
        %1052 = vmatpush1.xpose.msra.mxu0 0.0
        %1053 = vmatprep.subr.mxu0 0.0
        %1054 = vmatpush1.xpose.msra.mxu0 0.0
        %1055 = vmatprep.subr.mxu0 0.0
        %1056 = vmatpush1.xpose.msra.mxu0 0.0
        %1057 = vmatprep.subr.mxu0 0.0
        %1058 = vmatpush1.xpose.msra.mxu0 0.0
        %1059 = vmatprep.subr.mxu0 0.0
        %1060 = vmatpush1.xpose.msra.mxu0 %v1027
        %1061 = vmatprep.subr.mxu0 0.0
        %1062 = vmatpush2.xpose.msra.mxu0 0.0
        %1063 = vmatprep.subr.mxu0 0.0
        %1064 = vmatpush2.xpose.msra.mxu0 0.0
        %1065 = vmatprep.subr.mxu0 0.0
        %1066 = vmatpush2.xpose.msra.mxu0 0.0
        %1067 = vmatprep.subr.mxu0 0.0
        %1068 = vmatpush2.xpose.msra.mxu0 0.0
        %1069 = vmatprep.subr.mxu0 0.0
        %1070 = vmatpush2.xpose.msra.mxu0 0.0
        %1071 = vmatprep.subr.mxu0 0.0
        %1072 = vmatpush2.xpose.msra.mxu0 0.0
        %1073 = vmatprep.subr.mxu0 0.0
        %1074 = vmatpush2.xpose.msra.mxu0 0.0
        %1075 = vmatprep.subr.mxu0 0.0
        %1076 = vmatpush2.xpose.msra.mxu0 0.0
        %1077 = vmatprep.subr.mxu0 0.0
        %1078 = vmatpush2.xpose.msra.mxu0 0.0
        %1079 = vmatprep.subr.mxu0 0.0
        %1080 = vmatpush2.xpose.msra.mxu0 0.0
        %1081 = vmatprep.subr.mxu0 0.0
        %1082 = vmatpush2.xpose.msra.mxu0 0.0
        %1083 = vmatprep.subr.mxu0 0.0
        %1084 = vmatpush2.xpose.msra.mxu0 0.0
        %1085 = vmatprep.subr.mxu0 0.0
        %1086 = vmatpush2.xpose.msra.mxu0 0.0
        %1087 = vmatprep.subr.mxu0 0.0
        %1088 = vmatpush2.xpose.msra.mxu0 0.0
        %1089 = vmatprep.subr.mxu0 0.0
        %1090 = vmatpush2.xpose.msra.mxu0 0.0
        %1091 = vmatprep.subr.mxu0 0.0
        %1092 = vmatpush2.xpose.msra.mxu0 0.0
        %1093 = vmatprep.mubr.f32.mxu0 0.0
        %1094 = vmatmul.mubr.f32.gmra.mxu0 %v1025
        %v1095 = vpop.f32.mrf.mxu0
        %v1096 = vadd.f32 0.0, %v1095
        %v1097 = vpop.f32.mrf.mxu0
        %1098 = vdwg.mxu0
        %s1099 = scalar_lea.vmem [#allocation3], 8
        %v1100 = vld [vmem:[%s1099] sm:$0xff]
        %v1101 = vsel %vm835, %v1096, -inf
        %1102 = vmax.xlane.f32.xlu0 %v1101
        %v1103 = vpop.xlane.xlu0 %1102
        %v1104 = vmax.f32 %v1100, %v1103
        %v1105 = vsub.f32 %v1100, %v1104
        %v1106 = vmul.f32 %v1105, 1.442695
        %v1107 = vpow.pop %v1106
        %1109 = vset.pattern.permute.xlu0 0
        %1110 = vperm.xlu0 %1109, %v1104
        %v1111 = vpop.permute.xlu0 %1110
        %v1113 = vsub.f32 %v1096, %v1111
        %v1114 = vmul.f32 %v1113, 1.442695
        %v1115 = vpow.pop %v1114
        %s1116 = scalar_lea.vmem [#allocation4], 8
        %v1117 = vld [vmem:[%s1116] sm:$0xff]
        %v1118 = vmul.f32 %v1107, %v1117
        %v1119 = vsel %vm835, %v1115, 0.0
        %1120 = vadd.xlane.f32.xlu0 %v1119
        %v1121 = vpop.xlane.xlu0 %1120
        %v1122 = vadd.f32 %v1118, %v1121
        %1123 = vst.msk [vmem:[%s1116] sm:$0xff] %vm934, %v1122
        %1125 = vrot.lane.b32.xlu0 %v831, 120
        %v1126 = vpop.permute.xlu0 %1125
        %v1129 = vsel %vm835, %v1115, 0
        %1131 = vmatprep.subr.mxu0 0.0
        %1132 = vmatpush1.msra.mxu0 0.0
        %1133 = vmatprep.subr.mxu0 0.0
        %1134 = vmatpush1.msra.mxu0 0.0
        %1135 = vmatprep.subr.mxu0 0.0
        %1136 = vmatpush1.msra.mxu0 0.0
        %1137 = vmatprep.subr.mxu0 0.0
        %1138 = vmatpush1.msra.mxu0 0.0
        %1139 = vmatprep.subr.mxu0 0.0
        %1140 = vmatpush1.msra.mxu0 0.0
        %1141 = vmatprep.subr.mxu0 0.0
        %1142 = vmatpush1.msra.mxu0 0.0
        %1143 = vmatprep.subr.mxu0 0.0
        %1144 = vmatpush1.msra.mxu0 0.0
        %1145 = vmatprep.subr.mxu0 0.0
        %1146 = vmatpush1.msra.mxu0 0.0
        %1147 = vmatprep.subr.mxu0 0.0
        %1148 = vmatpush1.msra.mxu0 0.0
        %1149 = vmatprep.subr.mxu0 0.0
        %1150 = vmatpush1.msra.mxu0 0.0
        %1151 = vmatprep.subr.mxu0 0.0
        %1152 = vmatpush1.msra.mxu0 0.0
        %1153 = vmatprep.subr.mxu0 0.0
        %1154 = vmatpush1.msra.mxu0 0.0
        %1155 = vmatprep.subr.mxu0 0.0
        %1156 = vmatpush1.msra.mxu0 0.0
        %1157 = vmatprep.subr.mxu0 0.0
        %1158 = vmatpush1.msra.mxu0 0.0
        %1159 = vmatprep.subr.mxu0 0.0
        %1160 = vmatpush1.msra.mxu0 0.0
        %1161 = vmatprep.subr.mxu0 0.0
        %1162 = vmatpush1.msra.mxu0 %v1126
        %1163 = vmatprep.subr.mxu0 0.0
        %1164 = vmatpush2.msra.mxu0 0.0
        %1165 = vmatprep.subr.mxu0 0.0
        %1166 = vmatpush2.msra.mxu0 0.0
        %1167 = vmatprep.subr.mxu0 0.0
        %1168 = vmatpush2.msra.mxu0 0.0
        %1169 = vmatprep.subr.mxu0 0.0
        %1170 = vmatpush2.msra.mxu0 0.0
        %1171 = vmatprep.subr.mxu0 0.0
        %1172 = vmatpush2.msra.mxu0 0.0
        %1173 = vmatprep.subr.mxu0 0.0
        %1174 = vmatpush2.msra.mxu0 0.0
        %1175 = vmatprep.subr.mxu0 0.0
        %1176 = vmatpush2.msra.mxu0 0.0
        %1177 = vmatprep.subr.mxu0 0.0
        %1178 = vmatpush2.msra.mxu0 0.0
        %1179 = vmatprep.subr.mxu0 0.0
        %1180 = vmatpush2.msra.mxu0 0.0
        %1181 = vmatprep.subr.mxu0 0.0
        %1182 = vmatpush2.msra.mxu0 0.0
        %1183 = vmatprep.subr.mxu0 0.0
        %1184 = vmatpush2.msra.mxu0 0.0
        %1185 = vmatprep.subr.mxu0 0.0
        %1186 = vmatpush2.msra.mxu0 0.0
        %1187 = vmatprep.subr.mxu0 0.0
        %1188 = vmatpush2.msra.mxu0 0.0
        %1189 = vmatprep.subr.mxu0 0.0
        %1190 = vmatpush2.msra.mxu0 0.0
        %1191 = vmatprep.subr.mxu0 0.0
        %1192 = vmatpush2.msra.mxu0 0.0
        %1193 = vmatprep.subr.mxu0 0.0
        %1194 = vmatpush2.msra.mxu0 0.0
        %1195 = vmatprep.mubr.f32.mxu0 0.0
        %1196 = vmatmul.mubr.f32.gmra.mxu0 %v1129
        %v1197 = vpop.f32.mrf.mxu0
        %v1198 = vadd.f32 0.0, %v1197
        %v1199 = vpop.f32.mrf.mxu0
        %1200 = vdwg.mxu0
        %v1201 = vld [vmem:[#allocation5] sm:$0xff]
        %1203 = vset.pattern.permute.xlu0 0
        %1204 = vperm.xlu0 %1203, %v1107
        %v1205 = vpop.permute.xlu0 %1204
        %v1207 = vmul.f32 %v1205, %v1201
        %1209 = vrot.lane.b32.xlu0 %v1198, 8
        %v1210 = vpop.permute.xlu0 %1209
        %v1212 = vadd.f32 %v1207, %v1210
        %vm1213 = vcmask 130112
        %1214 = vst.msk [vmem:[#allocation5] sm:$0xff] %vm1213, %v1212
        %1215 = vst.msk [vmem:[%s1099] sm:$0xff] %vm934, %v1104
        %v1216 = vld [vmem:[#allocation2] sm:$0xff]
        %1218 = vrot.lane.b32.xlu0 %v1216, 112
        %v1219 = vpop.permute.xlu0 %1218
        %1220 = vrot.lane.b32.xlu0 %v746, 112
        %v1221 = vpop.permute.xlu0 %1220
        %v1222 = vsel %vm835, %v1219, 0
        %v1224 = vsel %vm835, %v1221, 0
        %1226 = vmatprep.subr.mxu0 0.0
        %1227 = vmatpush1.xpose.msra.mxu0 0.0
        %1228 = vmatprep.subr.mxu0 0.0
        %1229 = vmatpush1.xpose.msra.mxu0 0.0
        %1230 = vmatprep.subr.mxu0 0.0
        %1231 = vmatpush1.xpose.msra.mxu0 0.0
        %1232 = vmatprep.subr.mxu0 0.0
        %1233 = vmatpush1.xpose.msra.mxu0 0.0
        %1234 = vmatprep.subr.mxu0 0.0
        %1235 = vmatpush1.xpose.msra.mxu0 0.0
        %1236 = vmatprep.subr.mxu0 0.0
        %1237 = vmatpush1.xpose.msra.mxu0 0.0
        %1238 = vmatprep.subr.mxu0 0.0
        %1239 = vmatpush1.xpose.msra.mxu0 0.0
        %1240 = vmatprep.subr.mxu0 0.0
        %1241 = vmatpush1.xpose.msra.mxu0 0.0
        %1242 = vmatprep.subr.mxu0 0.0
        %1243 = vmatpush1.xpose.msra.mxu0 0.0
        %1244 = vmatprep.subr.mxu0 0.0
        %1245 = vmatpush1.xpose.msra.mxu0 0.0
        %1246 = vmatprep.subr.mxu0 0.0
        %1247 = vmatpush1.xpose.msra.mxu0 0.0
        %1248 = vmatprep.subr.mxu0 0.0
        %1249 = vmatpush1.xpose.msra.mxu0 0.0
        %1250 = vmatprep.subr.mxu0 0.0
        %1251 = vmatpush1.xpose.msra.mxu0 0.0
        %1252 = vmatprep.subr.mxu0 0.0
        %1253 = vmatpush1.xpose.msra.mxu0 0.0
        %1254 = vmatprep.subr.mxu0 0.0
        %1255 = vmatpush1.xpose.msra.mxu0 0.0
        %1256 = vmatprep.subr.mxu0 0.0
        %1257 = vmatpush1.xpose.msra.mxu0 %v1224
        %1258 = vmatprep.subr.mxu0 0.0
        %1259 = vmatpush2.xpose.msra.mxu0 0.0
        %1260 = vmatprep.subr.mxu0 0.0
        %1261 = vmatpush2.xpose.msra.mxu0 0.0
        %1262 = vmatprep.subr.mxu0 0.0
        %1263 = vmatpush2.xpose.msra.mxu0 0.0
        %1264 = vmatprep.subr.mxu0 0.0
        %1265 = vmatpush2.xpose.msra.mxu0 0.0
        %1266 = vmatprep.subr.mxu0 0.0
        %1267 = vmatpush2.xpose.msra.mxu0 0.0
        %1268 = vmatprep.subr.mxu0 0.0
        %1269 = vmatpush2.xpose.msra.mxu0 0.0
        %1270 = vmatprep.subr.mxu0 0.0
        %1271 = vmatpush2.xpose.msra.mxu0 0.0
        %1272 = vmatprep.subr.mxu0 0.0
        %1273 = vmatpush2.xpose.msra.mxu0 0.0
        %1274 = vmatprep.subr.mxu0 0.0
        %1275 = vmatpush2.xpose.msra.mxu0 0.0
        %1276 = vmatprep.subr.mxu0 0.0
        %1277 = vmatpush2.xpose.msra.mxu0 0.0
        %1278 = vmatprep.subr.mxu0 0.0
        %1279 = vmatpush2.xpose.msra.mxu0 0.0
        %1280 = vmatprep.subr.mxu0 0.0
        %1281 = vmatpush2.xpose.msra.mxu0 0.0
        %1282 = vmatprep.subr.mxu0 0.0
        %1283 = vmatpush2.xpose.msra.mxu0 0.0
        %1284 = vmatprep.subr.mxu0 0.0
        %1285 = vmatpush2.xpose.msra.mxu0 0.0
        %1286 = vmatprep.subr.mxu0 0.0
        %1287 = vmatpush2.xpose.msra.mxu0 0.0
        %1288 = vmatprep.subr.mxu0 0.0
        %1289 = vmatpush2.xpose.msra.mxu0 0.0
        %1290 = vmatprep.mubr.f32.mxu0 0.0
        %1291 = vmatmul.mubr.f32.gmra.mxu0 %v1222
        %v1292 = vpop.f32.mrf.mxu0
        %v1293 = vadd.f32 0.0, %v1292
        %v1294 = vpop.f32.mrf.mxu0
        %1295 = vdwg.mxu0
        %s1296 = scalar_lea.vmem [#allocation3], 16
        %v1297 = vld [vmem:[%s1296] sm:$0xff]
        %v1298 = vsel %vm835, %v1293, -inf
        %1299 = vmax.xlane.f32.xlu0 %v1298
        %v1300 = vpop.xlane.xlu0 %1299
        %v1301 = vmax.f32 %v1297, %v1300
        %v1302 = vsub.f32 %v1297, %v1301
        %v1303 = vmul.f32 %v1302, 1.442695
        %v1304 = vpow.pop %v1303
        %1306 = vset.pattern.permute.xlu0 0
        %1307 = vperm.xlu0 %1306, %v1301
        %v1308 = vpop.permute.xlu0 %1307
        %v1310 = vsub.f32 %v1293, %v1308
        %v1311 = vmul.f32 %v1310, 1.442695
        %v1312 = vpow.pop %v1311
        %s1313 = scalar_lea.vmem [#allocation4], 16
        %v1314 = vld [vmem:[%s1313] sm:$0xff]
        %v1315 = vmul.f32 %v1304, %v1314
        %v1316 = vsel %vm835, %v1312, 0.0
        %1317 = vadd.xlane.f32.xlu0 %v1316
        %v1318 = vpop.xlane.xlu0 %1317
        %v1319 = vadd.f32 %v1315, %v1318
        %1320 = vst.msk [vmem:[%s1313] sm:$0xff] %vm934, %v1319
        %1321 = vrot.lane.b32.xlu0 %v831, 112
        %v1322 = vpop.permute.xlu0 %1321
        %v1325 = vsel %vm835, %v1312, 0
        %1327 = vmatprep.subr.mxu0 0.0
        %1328 = vmatpush1.msra.mxu0 0.0
        %1329 = vmatprep.subr.mxu0 0.0
        %1330 = vmatpush1.msra.mxu0 0.0
        %1331 = vmatprep.subr.mxu0 0.0
        %1332 = vmatpush1.msra.mxu0 0.0
        %1333 = vmatprep.subr.mxu0 0.0
        %1334 = vmatpush1.msra.mxu0 0.0
        %1335 = vmatprep.subr.mxu0 0.0
        %1336 = vmatpush1.msra.mxu0 0.0
        %1337 = vmatprep.subr.mxu0 0.0
        %1338 = vmatpush1.msra.mxu0 0.0
        %1339 = vmatprep.subr.mxu0 0.0
        %1340 = vmatpush1.msra.mxu0 0.0
        %1341 = vmatprep.subr.mxu0 0.0
        %1342 = vmatpush1.msra.mxu0 0.0
        %1343 = vmatprep.subr.mxu0 0.0
        %1344 = vmatpush1.msra.mxu0 0.0
        %1345 = vmatprep.subr.mxu0 0.0
        %1346 = vmatpush1.msra.mxu0 0.0
        %1347 = vmatprep.subr.mxu0 0.0
        %1348 = vmatpush1.msra.mxu0 0.0
        %1349 = vmatprep.subr.mxu0 0.0
        %1350 = vmatpush1.msra.mxu0 0.0
        %1351 = vmatprep.subr.mxu0 0.0
        %1352 = vmatpush1.msra.mxu0 0.0
        %1353 = vmatprep.subr.mxu0 0.0
        %1354 = vmatpush1.msra.mxu0 0.0
        %1355 = vmatprep.subr.mxu0 0.0
        %1356 = vmatpush1.msra.mxu0 0.0
        %1357 = vmatprep.subr.mxu0 0.0
        %1358 = vmatpush1.msra.mxu0 %v1322
        %1359 = vmatprep.subr.mxu0 0.0
        %1360 = vmatpush2.msra.mxu0 0.0
        %1361 = vmatprep.subr.mxu0 0.0
        %1362 = vmatpush2.msra.mxu0 0.0
        %1363 = vmatprep.subr.mxu0 0.0
        %1364 = vmatpush2.msra.mxu0 0.0
        %1365 = vmatprep.subr.mxu0 0.0
        %1366 = vmatpush2.msra.mxu0 0.0
        %1367 = vmatprep.subr.mxu0 0.0
        %1368 = vmatpush2.msra.mxu0 0.0
        %1369 = vmatprep.subr.mxu0 0.0
        %1370 = vmatpush2.msra.mxu0 0.0
        %1371 = vmatprep.subr.mxu0 0.0
        %1372 = vmatpush2.msra.mxu0 0.0
        %1373 = vmatprep.subr.mxu0 0.0
        %1374 = vmatpush2.msra.mxu0 0.0
        %1375 = vmatprep.subr.mxu0 0.0
        %1376 = vmatpush2.msra.mxu0 0.0
        %1377 = vmatprep.subr.mxu0 0.0
        %1378 = vmatpush2.msra.mxu0 0.0
        %1379 = vmatprep.subr.mxu0 0.0
        %1380 = vmatpush2.msra.mxu0 0.0
        %1381 = vmatprep.subr.mxu0 0.0
        %1382 = vmatpush2.msra.mxu0 0.0
        %1383 = vmatprep.subr.mxu0 0.0
        %1384 = vmatpush2.msra.mxu0 0.0
        %1385 = vmatprep.subr.mxu0 0.0
        %1386 = vmatpush2.msra.mxu0 0.0
        %1387 = vmatprep.subr.mxu0 0.0
        %1388 = vmatpush2.msra.mxu0 0.0
        %1389 = vmatprep.subr.mxu0 0.0
        %1390 = vmatpush2.msra.mxu0 0.0
        %1391 = vmatprep.mubr.f32.mxu0 0.0
        %1392 = vmatmul.mubr.f32.gmra.mxu0 %v1325
        %v1393 = vpop.f32.mrf.mxu0
        %v1394 = vadd.f32 0.0, %v1393
        %v1395 = vpop.f32.mrf.mxu0
        %1396 = vdwg.mxu0
        %v1397 = vld [vmem:[#allocation5] sm:$0xff]
        %1399 = vset.pattern.permute.xlu0 0
        %1400 = vperm.xlu0 %1399, %v1304
        %v1401 = vpop.permute.xlu0 %1400
        %v1403 = vmul.f32 %v1401, %v1397
        %1405 = vrot.lane.b32.xlu0 %v1394, 16
        %v1406 = vpop.permute.xlu0 %1405
        %v1408 = vadd.f32 %v1403, %v1406
        %vm1409 = vcmask 195712
        %1410 = vst.msk [vmem:[#allocation5] sm:$0xff] %vm1409, %v1408
        %1411 = vst.msk [vmem:[%s1296] sm:$0xff] %vm934, %v1301
        %v1412 = vld [vmem:[#allocation2] sm:$0xff]
        %1414 = vrot.lane.b32.xlu0 %v1412, 104
        %v1415 = vpop.permute.xlu0 %1414
        %1416 = vrot.lane.b32.xlu0 %v746, 104
        %v1417 = vpop.permute.xlu0 %1416
        %v1418 = vsel %vm835, %v1415, 0
        %v1420 = vsel %vm835, %v1417, 0
        %1422 = vmatprep.subr.mxu0 0.0
        %1423 = vmatpush1.xpose.msra.mxu0 0.0
        %1424 = vmatprep.subr.mxu0 0.0
        %1425 = vmatpush1.xpose.msra.mxu0 0.0
        %1426 = vmatprep.subr.mxu0 0.0
        %1427 = vmatpush1.xpose.msra.mxu0 0.0
        %1428 = vmatprep.subr.mxu0 0.0
        %1429 = vmatpush1.xpose.msra.mxu0 0.0
        %1430 = vmatprep.subr.mxu0 0.0
        %1431 = vmatpush1.xpose.msra.mxu0 0.0
        %1432 = vmatprep.subr.mxu0 0.0
        %1433 = vmatpush1.xpose.msra.mxu0 0.0
        %1434 = vmatprep.subr.mxu0 0.0
        %1435 = vmatpush1.xpose.msra.mxu0 0.0
        %1436 = vmatprep.subr.mxu0 0.0
        %1437 = vmatpush1.xpose.msra.mxu0 0.0
        %1438 = vmatprep.subr.mxu0 0.0
        %1439 = vmatpush1.xpose.msra.mxu0 0.0
        %1440 = vmatprep.subr.mxu0 0.0
        %1441 = vmatpush1.xpose.msra.mxu0 0.0
        %1442 = vmatprep.subr.mxu0 0.0
        %1443 = vmatpush1.xpose.msra.mxu0 0.0
        %1444 = vmatprep.subr.mxu0 0.0
        %1445 = vmatpush1.xpose.msra.mxu0 0.0
        %1446 = vmatprep.subr.mxu0 0.0
        %1447 = vmatpush1.xpose.msra.mxu0 0.0
        %1448 = vmatprep.subr.mxu0 0.0
        %1449 = vmatpush1.xpose.msra.mxu0 0.0
        %1450 = vmatprep.subr.mxu0 0.0
        %1451 = vmatpush1.xpose.msra.mxu0 0.0
        %1452 = vmatprep.subr.mxu0 0.0
        %1453 = vmatpush1.xpose.msra.mxu0 %v1420
        %1454 = vmatprep.subr.mxu0 0.0
        %1455 = vmatpush2.xpose.msra.mxu0 0.0
        %1456 = vmatprep.subr.mxu0 0.0
        %1457 = vmatpush2.xpose.msra.mxu0 0.0
        %1458 = vmatprep.subr.mxu0 0.0
        %1459 = vmatpush2.xpose.msra.mxu0 0.0
        %1460 = vmatprep.subr.mxu0 0.0
        %1461 = vmatpush2.xpose.msra.mxu0 0.0
        %1462 = vmatprep.subr.mxu0 0.0
        %1463 = vmatpush2.xpose.msra.mxu0 0.0
        %1464 = vmatprep.subr.mxu0 0.0
        %1465 = vmatpush2.xpose.msra.mxu0 0.0
        %1466 = vmatprep.subr.mxu0 0.0
        %1467 = vmatpush2.xpose.msra.mxu0 0.0
        %1468 = vmatprep.subr.mxu0 0.0
        %1469 = vmatpush2.xpose.msra.mxu0 0.0
        %1470 = vmatprep.subr.mxu0 0.0
        %1471 = vmatpush2.xpose.msra.mxu0 0.0
        %1472 = vmatprep.subr.mxu0 0.0
        %1473 = vmatpush2.xpose.msra.mxu0 0.0
        %1474 = vmatprep.subr.mxu0 0.0
        %1475 = vmatpush2.xpose.msra.mxu0 0.0
        %1476 = vmatprep.subr.mxu0 0.0
        %1477 = vmatpush2.xpose.msra.mxu0 0.0
        %1478 = vmatprep.subr.mxu0 0.0
        %1479 = vmatpush2.xpose.msra.mxu0 0.0
        %1480 = vmatprep.subr.mxu0 0.0
        %1481 = vmatpush2.xpose.msra.mxu0 0.0
        %1482 = vmatprep.subr.mxu0 0.0
        %1483 = vmatpush2.xpose.msra.mxu0 0.0
        %1484 = vmatprep.subr.mxu0 0.0
        %1485 = vmatpush2.xpose.msra.mxu0 0.0
        %1486 = vmatprep.mubr.f32.mxu0 0.0
        %1487 = vmatmul.mubr.f32.gmra.mxu0 %v1418
        %v1488 = vpop.f32.mrf.mxu0
        %v1489 = vadd.f32 0.0, %v1488
        %v1490 = vpop.f32.mrf.mxu0
        %1491 = vdwg.mxu0
        %s1492 = scalar_lea.vmem [#allocation3], 24
        %v1493 = vld [vmem:[%s1492] sm:$0xff]
        %v1494 = vsel %vm835, %v1489, -inf
        %1495 = vmax.xlane.f32.xlu0 %v1494
        %v1496 = vpop.xlane.xlu0 %1495
        %v1497 = vmax.f32 %v1493, %v1496
        %v1498 = vsub.f32 %v1493, %v1497
        %v1499 = vmul.f32 %v1498, 1.442695
        %v1500 = vpow.pop %v1499
        %1502 = vset.pattern.permute.xlu0 0
        %1503 = vperm.xlu0 %1502, %v1497
        %v1504 = vpop.permute.xlu0 %1503
        %v1506 = vsub.f32 %v1489, %v1504
        %v1507 = vmul.f32 %v1506, 1.442695
        %v1508 = vpow.pop %v1507
        %s1509 = scalar_lea.vmem [#allocation4], 24
        %v1510 = vld [vmem:[%s1509] sm:$0xff]
        %v1511 = vmul.f32 %v1500, %v1510
        %v1512 = vsel %vm835, %v1508, 0.0
        %1513 = vadd.xlane.f32.xlu0 %v1512
        %v1514 = vpop.xlane.xlu0 %1513
        %v1515 = vadd.f32 %v1511, %v1514
        %1516 = vst.msk [vmem:[%s1509] sm:$0xff] %vm934, %v1515
        %1517 = vrot.lane.b32.xlu0 %v831, 104
        %v1518 = vpop.permute.xlu0 %1517
        %v1521 = vsel %vm835, %v1508, 0
        %1523 = vmatprep.subr.mxu0 0.0
        %1524 = vmatpush1.msra.mxu0 0.0
        %1525 = vmatprep.subr.mxu0 0.0
        %1526 = vmatpush1.msra.mxu0 0.0
        %1527 = vmatprep.subr.mxu0 0.0
        %1528 = vmatpush1.msra.mxu0 0.0
        %1529 = vmatprep.subr.mxu0 0.0
        %1530 = vmatpush1.msra.mxu0 0.0
        %1531 = vmatprep.subr.mxu0 0.0
        %1532 = vmatpush1.msra.mxu0 0.0
        %1533 = vmatprep.subr.mxu0 0.0
        %1534 = vmatpush1.msra.mxu0 0.0
        %1535 = vmatprep.subr.mxu0 0.0
        %1536 = vmatpush1.msra.mxu0 0.0
        %1537 = vmatprep.subr.mxu0 0.0
        %1538 = vmatpush1.msra.mxu0 0.0
        %1539 = vmatprep.subr.mxu0 0.0
        %1540 = vmatpush1.msra.mxu0 0.0
        %1541 = vmatprep.subr.mxu0 0.0
        %1542 = vmatpush1.msra.mxu0 0.0
        %1543 = vmatprep.subr.mxu0 0.0
        %1544 = vmatpush1.msra.mxu0 0.0
        %1545 = vmatprep.subr.mxu0 0.0
        %1546 = vmatpush1.msra.mxu0 0.0
        %1547 = vmatprep.subr.mxu0 0.0
        %1548 = vmatpush1.msra.mxu0 0.0
        %1549 = vmatprep.subr.mxu0 0.0
        %1550 = vmatpush1.msra.mxu0 0.0
        %1551 = vmatprep.subr.mxu0 0.0
        %1552 = vmatpush1.msra.mxu0 0.0
        %1553 = vmatprep.subr.mxu0 0.0
        %1554 = vmatpush1.msra.mxu0 %v1518
        %1555 = vmatprep.subr.mxu0 0.0
        %1556 = vmatpush2.msra.mxu0 0.0
        %1557 = vmatprep.subr.mxu0 0.0
        %1558 = vmatpush2.msra.mxu0 0.0
        %1559 = vmatprep.subr.mxu0 0.0
        %1560 = vmatpush2.msra.mxu0 0.0
        %1561 = vmatprep.subr.mxu0 0.0
        %1562 = vmatpush2.msra.mxu0 0.0
        %1563 = vmatprep.subr.mxu0 0.0
        %1564 = vmatpush2.msra.mxu0 0.0
        %1565 = vmatprep.subr.mxu0 0.0
        %1566 = vmatpush2.msra.mxu0 0.0
        %1567 = vmatprep.subr.mxu0 0.0
        %1568 = vmatpush2.msra.mxu0 0.0
        %1569 = vmatprep.subr.mxu0 0.0
        %1570 = vmatpush2.msra.mxu0 0.0
        %1571 = vmatprep.subr.mxu0 0.0
        %1572 = vmatpush2.msra.mxu0 0.0
        %1573 = vmatprep.subr.mxu0 0.0
        %1574 = vmatpush2.msra.mxu0 0.0
        %1575 = vmatprep.subr.mxu0 0.0
        %1576 = vmatpush2.msra.mxu0 0.0
        %1577 = vmatprep.subr.mxu0 0.0
        %1578 = vmatpush2.msra.mxu0 0.0
        %1579 = vmatprep.subr.mxu0 0.0
        %1580 = vmatpush2.msra.mxu0 0.0
        %1581 = vmatprep.subr.mxu0 0.0
        %1582 = vmatpush2.msra.mxu0 0.0
        %1583 = vmatprep.subr.mxu0 0.0
        %1584 = vmatpush2.msra.mxu0 0.0
        %1585 = vmatprep.subr.mxu0 0.0
        %1586 = vmatpush2.msra.mxu0 0.0
        %1587 = vmatprep.mubr.f32.mxu0 0.0
        %1588 = vmatmul.mubr.f32.gmra.mxu0 %v1521
        %v1589 = vpop.f32.mrf.mxu0
        %v1590 = vadd.f32 0.0, %v1589
        %v1591 = vpop.f32.mrf.mxu0
        %1592 = vdwg.mxu0
        %v1593 = vld [vmem:[#allocation5] sm:$0xff]
        %1595 = vset.pattern.permute.xlu0 0
        %1596 = vperm.xlu0 %1595, %v1500
        %v1597 = vpop.permute.xlu0 %1596
        %v1599 = vmul.f32 %v1597, %v1593
        %1601 = vrot.lane.b32.xlu0 %v1590, 24
        %v1602 = vpop.permute.xlu0 %1601
        %v1604 = vadd.f32 %v1599, %v1602
        %vm1605 = vcmask 261312
        %1606 = vst.msk [vmem:[#allocation5] sm:$0xff] %vm1605, %v1604
        %1607 = vst.msk [vmem:[%s1492] sm:$0xff] %vm934, %v1497
        // Predicated region
        $region97: #{tpu_custom_call.1} parent=63 // pred_check
          %p1608 = pneg %p561
        $region98: #{tpu_custom_call.1} parent=63 // pred_check_branch
          %1610 = sbr.rel (%p1608) target = $region100
        $region99: #{tpu_custom_call.1} parent=63 // pred_region
          %v1611 = vld [vmem:[#allocation4] sm:$0xff]
          %v1612 = vld [vmem:[#allocation4 + $0x8] sm:$0xff]
          %v1613 = vld [vmem:[#allocation4 + $0x10] sm:$0xff]
          %v1614 = vld [vmem:[#allocation4 + $0x18] sm:$0xff]
          %v1615 = vrcp.pop %v1611
          %v1616 = vrcp.pop %v1612
          %v1617 = vrcp.pop %v1613
          %v1618 = vrcp.pop %v1614
          %v1619 = vld [vmem:[#allocation5] sm:$0xff]
          %1621 = vset.pattern.permute.xlu0 0
          %1622 = vperm.xlu0 %1621, %v1615
          %v1623 = vpop.permute.xlu0 %1622
          %v1625 = vmul.f32 %v1619, %v1623
          %1626 = vst.msk [vmem:[#allocation5] sm:$0xff] %vm835, %v1625
          %v1627 = vld [vmem:[#allocation5] sm:$0xff]
          %1629 = vset.pattern.permute.xlu0 0
          %1630 = vperm.xlu0 %1629, %v1616
          %v1631 = vpop.permute.xlu0 %1630
          %v1633 = vmul.f32 %v1627, %v1631
          %1634 = vst.msk [vmem:[#allocation5] sm:$0xff] %vm1213, %v1633
          %v1635 = vld [vmem:[#allocation5] sm:$0xff]
          %1637 = vset.pattern.permute.xlu0 0
          %1638 = vperm.xlu0 %1637, %v1617
          %v1639 = vpop.permute.xlu0 %1638
          %v1641 = vmul.f32 %v1635, %v1639
          %1642 = vst.msk [vmem:[#allocation5] sm:$0xff] %vm1409, %v1641
          %v1643 = vld [vmem:[#allocation5] sm:$0xff]
          %1645 = vset.pattern.permute.xlu0 0
          %1646 = vperm.xlu0 %1645, %v1618
          %v1647 = vpop.permute.xlu0 %1646
          %v1649 = vmul.f32 %v1643, %v1647
          %1650 = vst.msk [vmem:[#allocation5] sm:$0xff] %vm1605, %v1649
          %v1651 = vld [vmem:[#allocation5] sm:$0xff]
          %v1652 = vld [vmem:[#allocation17] sm:$0xff]
          %v1653 = vld [vmem:[#allocation17 + $0x8] sm:$0xff]
          %v1654 = vld [vmem:[#allocation17 + $0x10] sm:$0xff]
          %v1655 = vld [vmem:[#allocation17 + $0x18] sm:$0xff]
          %v1656 = vld [vmem:[%s10] sm:$0x1]
          %v1658 = vlaneseq
          %v1659 = vshrl.u32 %v1658, 7
          %v1660 = vsub.s32 0, %v1659
          %v1661 = vrot.slane %v1656, %v1660
          %v1664 = vsel %vm675, %v1651, 0
          %1666 = vmatprep.subr.mxu0 0.0
          %1667 = vmatpush1.msra.mxu0 0.0
          %1668 = vmatprep.subr.mxu0 0.0
          %1669 = vmatpush1.msra.mxu0 0.0
          %1670 = vmatprep.subr.mxu0 0.0
          %1671 = vmatpush1.msra.mxu0 0.0
          %1672 = vmatprep.subr.mxu0 0.0
          %1673 = vmatpush1.msra.mxu0 0.0
          %1674 = vmatprep.subr.mxu0 0.0
          %1675 = vmatpush1.msra.mxu0 0.0
          %1676 = vmatprep.subr.mxu0 0.0
          %1677 = vmatpush1.msra.mxu0 0.0
          %1678 = vmatprep.subr.mxu0 0.0
          %1679 = vmatpush1.msra.mxu0 0.0
          %1680 = vmatprep.subr.mxu0 0.0
          %1681 = vmatpush1.msra.mxu0 0.0
          %1682 = vmatprep.subr.mxu0 0.0
          %1683 = vmatpush1.msra.mxu0 0.0
          %1684 = vmatprep.subr.mxu0 0.0
          %1685 = vmatpush1.msra.mxu0 0.0
          %1686 = vmatprep.subr.mxu0 0.0
          %1687 = vmatpush1.msra.mxu0 0.0
          %1688 = vmatprep.subr.mxu0 0.0
          %1689 = vmatpush1.msra.mxu0 0.0
          %1690 = vmatprep.subr.mxu0 0.0
          %1691 = vmatpush1.msra.mxu0 %v1655
          %1692 = vmatprep.subr.mxu0 0.0
          %1693 = vmatpush1.msra.mxu0 %v1654
          %1694 = vmatprep.subr.mxu0 0.0
          %1695 = vmatpush1.msra.mxu0 %v1653
          %1696 = vmatprep.subr.mxu0 0.0
          %1697 = vmatpush1.msra.mxu0 %v1652
          %1698 = vmatprep.subr.mxu0 0.0
          %1699 = vmatpush2.msra.mxu0 0.0
          %1700 = vmatprep.subr.mxu0 0.0
          %1701 = vmatpush2.msra.mxu0 0.0
          %1702 = vmatprep.subr.mxu0 0.0
          %1703 = vmatpush2.msra.mxu0 0.0
          %1704 = vmatprep.subr.mxu0 0.0
          %1705 = vmatpush2.msra.mxu0 0.0
          %1706 = vmatprep.subr.mxu0 0.0
          %1707 = vmatpush2.msra.mxu0 0.0
          %1708 = vmatprep.subr.mxu0 0.0
          %1709 = vmatpush2.msra.mxu0 0.0
          %1710 = vmatprep.subr.mxu0 0.0
          %1711 = vmatpush2.msra.mxu0 0.0
          %1712 = vmatprep.subr.mxu0 0.0
          %1713 = vmatpush2.msra.mxu0 0.0
          %1714 = vmatprep.subr.mxu0 0.0
          %1715 = vmatpush2.msra.mxu0 0.0
          %1716 = vmatprep.subr.mxu0 0.0
          %1717 = vmatpush2.msra.mxu0 0.0
          %1718 = vmatprep.subr.mxu0 0.0
          %1719 = vmatpush2.msra.mxu0 0.0
          %1720 = vmatprep.subr.mxu0 0.0
          %1721 = vmatpush2.msra.mxu0 0.0
          %1722 = vmatprep.subr.mxu0 0.0
          %1723 = vmatpush2.msra.mxu0 0.0
          %1724 = vmatprep.subr.mxu0 0.0
          %1725 = vmatpush2.msra.mxu0 0.0
          %1726 = vmatprep.subr.mxu0 0.0
          %1727 = vmatpush2.msra.mxu0 0.0
          %1728 = vmatprep.subr.mxu0 0.0
          %1729 = vmatpush2.msra.mxu0 0.0
          %1730 = vmatprep.mubr.f32.mxu0 0.0
          %1731 = vmatmul.mubr.f32.gmra.mxu0 %v1664
          %v1732 = vpop.f32.mrf.mxu0
          %v1733 = vadd.f32 %v1661, %v1732
          %v1734 = vpop.f32.mrf.mxu0
          %1735 = vdwg.mxu0
          %1736 = vst.msk [vmem:[%s560] sm:$0xff] %vm675, %v1733
        $region100: #{tpu_custom_call.1} parent=63 // pred_fallthru
          _
        %s1737 = sand.u32 %s314, 1
        %s1738 = scalar_lea.sflag [#allocation8], %s1737
        %s1739 = sand.u32 %s314, 1
        %s1740 = smul.addr %s1739, 8
        %s1741 = scalar_lea.vmem [#allocation18], %s1740
        // Predicated region
        $region101: #{tpu_custom_call.1} parent=63 // pred_check
          %p1742 = pneg %p324
        $region102: #{tpu_custom_call.1} parent=63 // pred_check_branch
          %1744 = sbr.rel (%p1742) target = $region104
        $region103: #{tpu_custom_call.1} parent=63 // pred_region
          %s1746 = ssub.s32 128, 128
          %1747 = vsyncadd %s1738, %s1746
          %s1748 = sadd.s32 %s39, %s38
          %s1749 = smul.addr %s1748, 128
          %s1750 = scalar_lea.hbm %s11, %s1749
          %s1752 = sshll.u32 %s1741, 4
          %s1753 = int_to_ptr.vmem [resolvable:$true] %s1752
          %1755 = dma.vmem_to_hbm [thread:$0]  %s1753, 128, %s1750, %s1738
        $region104: #{tpu_custom_call.1} parent=63 // pred_fallthru
          _
      $region64: #{tpu_custom_call.1} parent=5 // pred_fallthru
        _
      %p1756 = scmp.le.s32.totalorder 2, %s28
      // Predicated region
      $region105: #{tpu_custom_call.1} parent=5 // pred_check
        %p1757 = pneg %p1756
      $region106: #{tpu_custom_call.1} parent=5 // pred_check_branch
        %1759 = sbr.rel (%p1757) target = $region108
      $region107: #{tpu_custom_call.1} parent=5 // pred_region
        %s1760 = ssub.s32 %s28, 2
        // Predicated region
        $region109: #{tpu_custom_call.1} parent=107 // pred_check
          %p1761 = pneg %p330
        $region110: #{tpu_custom_call.1} parent=107 // pred_check_branch
          %1763 = sbr.rel (%p1761) target = $region112
        $region111: #{tpu_custom_call.1} parent=107 // pred_region
          %s1764 = sand.u32 %s315, 1
          %s1765 = scalar_lea.sflag [#allocation8], %s1764
          %s1766 = sand.u32 %s315, 1
          %s1767 = smul.addr %s1766, 8
          %s1768 = scalar_lea.vmem [#allocation18], %s1767
          %1769 = dma.done %s1765, 128
        $region112: #{tpu_custom_call.1} parent=107 // pred_fallthru
          _
      $region108: #{tpu_custom_call.1} parent=5 // pred_fallthru
        _
    $region6: #{tpu_custom_call.1} parent=1 // loop_footer
      %s32 = sadd.s32 1, %s28
    $region7: #{tpu_custom_call.1} parent=1 // loop_footer_branch
      %27 = sbr.rel target = $region3
    $region8: #{tpu_custom_call.1} parent=1 // loop_exit
      _
    %1770 = vsyncpa [#allocation7], 1
    %s1771 = scalar_lea.sflag [#allocation7], 1
    %1772 = vsyncpa %s1771, 1
    %1773 = vsyncpa [#allocation10], 1
    %s1774 = scalar_lea.sflag [#allocation10], 1
    %1775 = vsyncpa %s1774, 1
    %1776 = vsyncpa [#allocation13], 1
    %1777 = vsyncpa [#allocation16], 1
    %1778 = vsyncpa [#allocation8], 1
    %s1779 = scalar_lea.sflag [#allocation8], 1
    %1780 = vsyncpa %s1779, 1

</llo_original>
